<compile_context>
chip_gen: v7x
topology: tpu7x:2x2x1
jax: 0.10.0
libtpu: 0.0.40
codegen_flags: <defaults>
</compile_context>

<pallas_src>
import jax
import jax.numpy as jnp
from jax.experimental import pallas as pl
from jax.experimental.pallas import tpu as pltpu


NEG_SLOPE = 0.01  # F.leaky_relu default


def _leaky_relu(x):
    return jnp.where(x > 0, x, NEG_SLOPE * x)


def da_img_kernel(x_ref, w1_ref, b1_ref, w2_ref, b2_ref, w3_ref, b3_ref, o_ref):
    # x_ref:  (1, Cin, T) bf16 tile of pixels (channel-major)
    # w1_ref: (256, Cin) bf16   b1_ref: (256, 1) f32
    # w2_ref: (128, 256) bf16   b2_ref: (128, 1) f32
    # w3_ref: (128, 1)   f32    b3_ref: (1, 1)   f32
    # o_ref:  (1, 1, T)  f32
    x = x_ref[0]  # (Cin, T) bf16

    # layer 1: (256, Cin) @ (Cin, T) on the MXU, f32 accumulation.
    h1 = jnp.dot(w1_ref[...], x, preferred_element_type=jnp.float32)
    h1 = _leaky_relu(h1 + b1_ref[...])                       # (256, T) f32

    # layer 2: (128, 256) @ (256, T) on the MXU (bf16 inputs, f32 acc).
    h2 = jnp.dot(w2_ref[...], h1.astype(jnp.bfloat16),
                 preferred_element_type=jnp.float32)
    h2 = _leaky_relu(h2 + b2_ref[...])                       # (128, T) f32

    # layer 3: 128 -> 1 on VPU + XLU (broadcast-multiply, cross-sublane sum)
    # instead of an MXU pass that would yield one useful column.
    out = jnp.sum(h2 * w3_ref[...], axis=0, keepdims=True) + b3_ref[...]  # (1, T)

    o_ref[...] = out.reshape(o_ref.shape).astype(o_ref.dtype)


def da_img_forward(x_nchw, params, *, t_pix=1024):
    """x_nchw: (N, Cin, H, W) float32. Returns (N*H*W, 1) like the PyTorch module."""
    N, Cin, H, W = x_nchw.shape
    HW = H * W
    w1, b1, w2, b2, w3, b3 = params  # BN already folded; w1/w2 bf16

    # Pixel tile: large (grid-step overhead ~0.35us), capped so tiny feature
    # maps are not over-padded; always a multiple of 128 (lane width).
    t_eff = min(t_pix, pl.cdiv(HW, 128) * 128)
    HW_pad = pl.cdiv(HW, t_eff) * t_eff

    # NCHW -> (N, Cin, HW) is a free reshape (no transpose); cast to bf16
    # before any padding so HBM traffic for x is halved.
    x = x_nchw.reshape(N, Cin, HW).astype(jnp.bfloat16)
    if HW_pad != HW:
        x = jnp.pad(x, ((0, 0), (0, 0), (0, HW_pad - HW)))

    grid = (N, HW_pad // t_eff)

    out = pl.pallas_call(
        da_img_kernel,
        out_shape=jax.ShapeDtypeStruct((N, 1, HW_pad), jnp.float32),
        grid_spec=pltpu.PrefetchScalarGridSpec(
            num_scalar_prefetch=0,
            grid=grid,
            in_specs=[
                pl.BlockSpec((1, Cin, t_eff), lambda n, p: (n, 0, p)),
                # Constant-index weights/biases: fetched once, reused every step.
                pl.BlockSpec(w1.shape, lambda n, p: (0, 0)),
                pl.BlockSpec(b1.shape, lambda n, p: (0, 0)),
                pl.BlockSpec(w2.shape, lambda n, p: (0, 0)),
                pl.BlockSpec(b2.shape, lambda n, p: (0, 0)),
                pl.BlockSpec(w3.shape, lambda n, p: (0, 0)),
                pl.BlockSpec(b3.shape, lambda n, p: (0, 0)),
            ],
            out_specs=pl.BlockSpec((1, 1, t_eff), lambda n, p: (n, 0, p)),
        ),
        compiler_params=pltpu.CompilerParams(
            dimension_semantics=("parallel", "parallel"),
            # Explicit budget: covers t_pix up to ~2048 / Cin up to ~2048 with
            # double-buffered x; raises v5e's 16 MiB default, safe on v7x's
            # 64 MiB physical VMEM.
            vmem_limit_bytes=32 * 1024 * 1024,
        ),
    )(x, w1, b1, w2, b2, w3, b3)

    # (N, 1, HW_pad) -> drop pad -> (N*H*W, 1). Identical element order to
    # PyTorch's NCHW (N,1,H,W).view(-1, 1) since the channel dim is 1.
    return out[:, :, :HW].reshape(-1, 1)


def make_params(key, in_channels):
    """Deterministic synthetic parameters matching the module's shapes.

    conv1: (256, Cin), bias (256,)   bn1: gamma/beta (256,)
    conv2: (128, 256), bias (128,)   bn2: gamma/beta (128,)
    conv3: (1, 128),   bias (1,)
    BatchNorm (inference mode, running_mean=0, running_var=1, eps=1e-5) is
    folded into the preceding conv:  y = gamma/sqrt(1+eps) * (Wx + b) + beta.
    Folded conv1/conv2 weights are cast to bf16 for the MXU; biases, the
    128->1 projection and all elementwise math stay f32.
    """
    eps = 1e-5
    ks = jax.random.split(key, 5)
    std = 0.1

    w1 = std * jax.random.normal(ks[0], (256, in_channels), jnp.float32)
    b1 = jnp.zeros((256,), jnp.float32)
    g1 = std * jax.random.normal(ks[1], (256,), jnp.float32)
    beta1 = jnp.zeros((256,), jnp.float32)

    w2 = std * jax.random.normal(ks[2], (128, 256), jnp.float32)
    b2 = jnp.zeros((128,), jnp.float32)
    g2 = std * jax.random.normal(ks[3], (128,), jnp.float32)
    beta2 = jnp.zeros((128,), jnp.float32)

    # conv3 is NOT in the init loop in the PyTorch module -> default init;
    # here we just use a deterministic normal draw (synthetic weights).
    w3 = std * jax.random.normal(ks[4], (1, 128), jnp.float32)
    b3 = jnp.zeros((1,), jnp.float32)

    s1 = g1 / jnp.sqrt(1.0 + eps)
    w1f = (w1 * s1[:, None]).astype(jnp.bfloat16)     # (256, Cin) bf16
    b1f = (b1 * s1 + beta1)[:, None]                  # (256, 1)   f32

    s2 = g2 / jnp.sqrt(1.0 + eps)
    w2f = (w2 * s2[:, None]).astype(jnp.bfloat16)     # (128, 256) bf16
    b2f = (b2 * s2 + beta2)[:, None]                  # (128, 1)   f32

    return (
        w1f, b1f,
        w2f, b2f,
        jnp.asarray(w3.T),        # (128, 1) f32
        b3[:, None],              # (1, 1)   f32
    )


def da_img_reference(x_nchw, params):
    """Pure-JAX reference, mirroring the kernel's dtype path (bf16 in, f32 acc)."""
    N, Cin, H, W = x_nchw.shape
    w1, b1, w2, b2, w3, b3 = params
    x = x_nchw.reshape(N, Cin, H * W).astype(jnp.bfloat16).astype(jnp.float32)
    h1 = _leaky_relu(jnp.einsum("oc,ncp->nop", w1.astype(jnp.float32), x) + b1[None])
    h1 = h1.astype(jnp.bfloat16).astype(jnp.float32)
    h2 = _leaky_relu(jnp.einsum("oc,ncp->nop", w2.astype(jnp.float32), h1) + b2[None])
    out = jnp.sum(h2 * w3[None], axis=1, keepdims=True) + b3[None]
    return out.reshape(-1, 1)


if __name__ == "__main__":
    key = jax.random.PRNGKey(0)
    k_x, k_p = jax.random.split(key)

    N, Cin, H, W = 2, 4, 16, 16
    x = jax.random.normal(k_x, (N, Cin, H, W), jnp.float32)

    params = make_params(k_p, Cin)

    out = da_img_forward(x, params)
    out = jax.block_until_ready(out)

    ref = da_img_reference(x, params)
    assert out.shape == (N * H * W, 1), out.shape
    err = float(jnp.max(jnp.abs(out - ref)))
    assert jnp.allclose(out, ref, atol=1e-3, rtol=1e-3), err

    print("KERNEL_OK")
</pallas_src>

<mosaic_0001>
module attributes {stable_mosaic.version = 11 : i64} {
  func.func @da_img_kernel(%arg0: i32, %arg1: i32, %arg2: memref<1x4x256xbf16, #tpu.memory_space<vmem>>, %arg3: memref<256x4xbf16, #tpu.memory_space<vmem>>, %arg4: memref<256x1xf32, #tpu.memory_space<vmem>>, %arg5: memref<128x256xbf16, #tpu.memory_space<vmem>>, %arg6: memref<128x1xf32, #tpu.memory_space<vmem>>, %arg7: memref<128x1xf32, #tpu.memory_space<vmem>>, %arg8: memref<1x1xf32, #tpu.memory_space<vmem>>, %arg9: memref<1x1x256xf32, #tpu.memory_space<vmem>>) attributes {dimension_semantics = [#tpu.dimension_semantics<parallel>, #tpu.dimension_semantics<parallel>], iteration_bounds = array<i64: 2, 1>, scalar_prefetch = 0 : i64, scratch_operands = 0 : i64, tpu.core_type = #tpu.core_type<tc>, window_params = [{transform_indices = @transform_0, window_bounds = array<i64: 1, 4, 256>}, {pipeline_mode = #tpu.pipeline_mode<synchronous>, transform_indices = @transform_1, window_bounds = array<i64: 256, 4>}, {pipeline_mode = #tpu.pipeline_mode<synchronous>, transform_indices = @transform_2, window_bounds = array<i64: 256, 1>}, {pipeline_mode = #tpu.pipeline_mode<synchronous>, transform_indices = @transform_3, window_bounds = array<i64: 128, 256>}, {pipeline_mode = #tpu.pipeline_mode<synchronous>, transform_indices = @transform_4, window_bounds = array<i64: 128, 1>}, {pipeline_mode = #tpu.pipeline_mode<synchronous>, transform_indices = @transform_5, window_bounds = array<i64: 128, 1>}, {pipeline_mode = #tpu.pipeline_mode<synchronous>, transform_indices = @transform_6, window_bounds = array<i64: 1, 1>}, {transform_indices = @transform_7, window_bounds = array<i64: 1, 1, 256>}]} {
    %c0 = arith.constant 0 : index
    %c0_0 = arith.constant 0 : index
    %c0_1 = arith.constant 0 : index
    %0 = vector.load %arg2[%c0, %c0_0, %c0_1] : memref<1x4x256xbf16, #tpu.memory_space<vmem>>, vector<1x4x256xbf16>
    %1 = vector.shape_cast %0 : vector<1x4x256xbf16> to vector<4x256xbf16>
    %c0_2 = arith.constant 0 : index
    %c0_3 = arith.constant 0 : index
    %2 = vector.load %arg3[%c0_2, %c0_3] : memref<256x4xbf16, #tpu.memory_space<vmem>>, vector<256x4xbf16>
    %cst = arith.constant dense<0.000000e+00> : vector<256x256xf32>
    %3 = tpu.matmul %2, %1, %cst {dimension_numbers = #tpu.dot_dimension_numbers<[1], [0], [0], [1], [0, 0, 1, 1], [], []>} : vector<256x4xbf16>, vector<4x256xbf16>, vector<256x256xf32> -> vector<256x256xf32>
    %c0_4 = arith.constant 0 : index
    %c0_5 = arith.constant 0 : index
    %4 = vector.load %arg4[%c0_4, %c0_5] : memref<256x1xf32, #tpu.memory_space<vmem>>, vector<256x1xf32>
    %5 = vector.broadcast %4 : vector<256x1xf32> to vector<256x256xf32>
    %6 = arith.addf %3, %5 : vector<256x256xf32>
    %cst_6 = arith.constant 0.000000e+00 : f32
    %7 = vector.broadcast %cst_6 : f32 to vector<256x256xf32>
    %8 = arith.cmpf ogt, %6, %7 : vector<256x256xf32>
    %cst_7 = arith.constant 0.00999999977 : f32
    %9 = vector.broadcast %cst_7 : f32 to vector<256x256xf32>
    %10 = arith.mulf %9, %6 : vector<256x256xf32>
    %11 = arith.select %8, %6, %10 : vector<256x256xi1>, vector<256x256xf32>
    %c0_8 = arith.constant 0 : index
    %c0_9 = arith.constant 0 : index
    %12 = vector.load %arg5[%c0_8, %c0_9] : memref<128x256xbf16, #tpu.memory_space<vmem>>, vector<128x256xbf16>
    %13 = arith.truncf %11 : vector<256x256xf32> to vector<256x256xbf16>
    %cst_10 = arith.constant dense<0.000000e+00> : vector<128x256xf32>
    %14 = tpu.matmul %12, %13, %cst_10 {dimension_numbers = #tpu.dot_dimension_numbers<[1], [0], [0], [1], [0, 0, 1, 1], [], []>} : vector<128x256xbf16>, vector<256x256xbf16>, vector<128x256xf32> -> vector<128x256xf32>
    %c0_11 = arith.constant 0 : index
    %c0_12 = arith.constant 0 : index
    %15 = vector.load %arg6[%c0_11, %c0_12] : memref<128x1xf32, #tpu.memory_space<vmem>>, vector<128x1xf32>
    %16 = vector.broadcast %15 : vector<128x1xf32> to vector<128x256xf32>
    %17 = arith.addf %14, %16 : vector<128x256xf32>
    %cst_13 = arith.constant 0.000000e+00 : f32
    %18 = vector.broadcast %cst_13 : f32 to vector<128x256xf32>
    %19 = arith.cmpf ogt, %17, %18 : vector<128x256xf32>
    %cst_14 = arith.constant 0.00999999977 : f32
    %20 = vector.broadcast %cst_14 : f32 to vector<128x256xf32>
    %21 = arith.mulf %20, %17 : vector<128x256xf32>
    %22 = arith.select %19, %17, %21 : vector<128x256xi1>, vector<128x256xf32>
    %c0_15 = arith.constant 0 : index
    %c0_16 = arith.constant 0 : index
    %23 = vector.load %arg7[%c0_15, %c0_16] : memref<128x1xf32, #tpu.memory_space<vmem>>, vector<128x1xf32>
    %24 = vector.broadcast %23 : vector<128x1xf32> to vector<128x256xf32>
    %25 = arith.mulf %22, %24 : vector<128x256xf32>
    %cst_17 = arith.constant dense<0.000000e+00> : vector<256xf32>
    %26 = vector.multi_reduction <add>, %25, %cst_17 [0] : vector<128x256xf32> to vector<256xf32>
    %27 = vector.shape_cast %26 : vector<256xf32> to vector<1x256xf32>
    %c0_18 = arith.constant 0 : index
    %c0_19 = arith.constant 0 : index
    %28 = vector.load %arg8[%c0_18, %c0_19] : memref<1x1xf32, #tpu.memory_space<vmem>>, vector<1x1xf32>
    %29 = vector.broadcast %28 : vector<1x1xf32> to vector<1x256xf32>
    %30 = arith.addf %27, %29 : vector<1x256xf32>
    %31 = vector.shape_cast %30 : vector<1x256xf32> to vector<1x1x256xf32>
    %c0_20 = arith.constant 0 : index
    %c0_21 = arith.constant 0 : index
    %c0_22 = arith.constant 0 : index
    %32 = vector.load %arg9[%c0_20, %c0_21, %c0_22] : memref<1x1x256xf32, #tpu.memory_space<vmem>>, vector<1x1x256xf32>
    tpu.vector_store %arg9[%c0_20, %c0_21, %c0_22], %31 {strides = array<i32>} : memref<1x1x256xf32, #tpu.memory_space<vmem>>, vector<1x1x256xf32>,
    return
  }
  func.func @transform_0(%arg0: i32, %arg1: i32) -> (i32, i32, i32) {
    %c0_i32 = arith.constant 0 : i32
    %c0_i32_0 = arith.constant 0 : i32
    return %arg0, %c0_i32, %arg1 : i32, i32, i32
  }
  func.func @transform_1(%arg0: i32, %arg1: i32) -> (i32, i32) {
    %c0_i32 = arith.constant 0 : i32
    %c0_i32_0 = arith.constant 0 : i32
    %c0_i32_1 = arith.constant 0 : i32
    return %c0_i32, %c0_i32_0 : i32, i32
  }
  func.func @transform_2(%arg0: i32, %arg1: i32) -> (i32, i32) {
    %c0_i32 = arith.constant 0 : i32
    %c0_i32_0 = arith.constant 0 : i32
    %c0_i32_1 = arith.constant 0 : i32
    return %c0_i32, %c0_i32_0 : i32, i32
  }
  func.func @transform_3(%arg0: i32, %arg1: i32) -> (i32, i32) {
    %c0_i32 = arith.constant 0 : i32
    %c0_i32_0 = arith.constant 0 : i32
    %c0_i32_1 = arith.constant 0 : i32
    return %c0_i32, %c0_i32_0 : i32, i32
  }
  func.func @transform_4(%arg0: i32, %arg1: i32) -> (i32, i32) {
    %c0_i32 = arith.constant 0 : i32
    %c0_i32_0 = arith.constant 0 : i32
    %c0_i32_1 = arith.constant 0 : i32
    return %c0_i32, %c0_i32_0 : i32, i32
  }
  func.func @transform_5(%arg0: i32, %arg1: i32) -> (i32, i32) {
    %c0_i32 = arith.constant 0 : i32
    %c0_i32_0 = arith.constant 0 : i32
    %c0_i32_1 = arith.constant 0 : i32
    return %c0_i32, %c0_i32_0 : i32, i32
  }
  func.func @transform_6(%arg0: i32, %arg1: i32) -> (i32, i32) {
    %c0_i32 = arith.constant 0 : i32
    %c0_i32_0 = arith.constant 0 : i32
    %c0_i32_1 = arith.constant 0 : i32
    return %c0_i32, %c0_i32_0 : i32, i32
  }
  func.func @transform_7(%arg0: i32, %arg1: i32) -> (i32, i32, i32) {
    %c0_i32 = arith.constant 0 : i32
    %c0_i32_0 = arith.constant 0 : i32
    return %arg0, %c0_i32, %arg1 : i32, i32, i32
  }
}

</mosaic_0001>

<llo_original>
// kernel: tpu_custom_call.1
$region0: #{tpu_custom_call.1}
  #allocation0 [shape = 'u32[]', space=smem, size = 0x4, offset = 0x4, fixed_abs, tag = 'smem constant byte address 0x4 - core index']
  #allocation1 [shape = 'u32[144,128]{1,0:T(1,128)}', space=vmem, size = 0x12000, scoped, tag = 'internal scratch']
  #allocation2 [shape = 'f32[1,1]{1,0:T(1,128)S(1)}', space=vmem, size = 0x200, scoped, tag = 'scoped memory for tpu_custom_call.1']
  %s0 = inlined_call_operand.vmem [shape: bf16[2,4,256], index: 0, kind: input, shape index: {}]
  %s1 = inlined_call_operand.vmem [shape: bf16[256,4], index: 1, kind: input, shape index: {}]
  %s2 = inlined_call_operand.vmem [shape: f32[256,1], index: 2, kind: input, shape index: {}]
  %s3 = inlined_call_operand.vmem [shape: bf16[128,256], index: 3, kind: input, shape index: {}]
  %s4 = inlined_call_operand.vmem [shape: f32[128,1], index: 4, kind: input, shape index: {}]
  %s5 = inlined_call_operand.vmem [shape: f32[128,1], index: 5, kind: input, shape index: {}]
  %s6 = inlined_call_operand.<no memory space> [shape: f32[1,1], index: 6, kind: input, shape index: {}]
  %s7 = inlined_call_operand.hbm [shape: f32[2,1,256], index: 7, kind: output, shape index: {}]
  %s8 = sld [smem:[#allocation0]]
  $region61: #{tpu_custom_call.1} parent=0
    _
  %s10 = ssub.s32 1, %s8
  %s11 = scalar_select 0, %s10, %s8
  %v12 = vstv %s6
  %13 = vst [vmem:[#allocation2] sm:$0x1] %v12
  $region1: #{tpu_custom_call.1} parent=0
    #allocation3 [shape = 'u8[2048]{0}', space=vmem, size = 0x800, scoped, tag = 'output window, operand 0']
    #allocation4 [shape = 's32[2]{0}', space=sflag, size = 0x8, scoped, tag = 'scoped memory for tpu_custom_call.1']
    %14 = vsyncpa [#allocation4], 0
    %s15 = scalar_lea.sflag [#allocation4], 1
    %16 = vsyncpa %s15, 0
    loop: start=0, step=1, limit=4
    $region2: #{tpu_custom_call.1} parent=1 // loop_pre_header
      _
    $region3: #{tpu_custom_call.1} parent=1 // loop_header
      %s18 = sphi 0, %s22
      %p19 = scmp.ge.s32.totalorder %s18, 4
      %s25 = sphi 0, %s37
      %s26 = sphi 0, %s33
      %s27 = sphi 0, %s25
      %s28 = sphi 0, %s26
      %s29 = sphi 0, %s27
      %s30 = sphi 0, %s28
      %s42 = sphi 0, %s44
      %s45 = sphi 0, %s42
      %s46 = sphi 0, %s45
      %s62 = sphi 0, %s46
      %s66 = sphi 0, %s66
      %s68 = sphi 0, %s66
      %s69 = sphi 0, %s68
      %s83 = sphi 0, %s69
      %s87 = sphi 0, %s87
      %s89 = sphi 0, %s87
      %s90 = sphi 0, %s89
      %s104 = sphi 0, %s90
      %s108 = sphi 0, %s108
      %s110 = sphi 0, %s108
      %s111 = sphi 0, %s110
      %s125 = sphi 0, %s111
      %s129 = sphi 0, %s129
      %s131 = sphi 0, %s129
      %s132 = sphi 0, %s131
      %s146 = sphi 0, %s132
      %s150 = sphi 0, %s150
      %s152 = sphi 0, %s150
      %s153 = sphi 0, %s152
      %s167 = sphi 0, %s153
      %s171 = sphi 0, %s171
      %s173 = sphi 0, %s171
      %s174 = sphi 0, %s173
      %s188 = sphi 0, %s174
      %s196 = sphi 0, %s198
      %s199 = sphi 0, %s196
      %s200 = sphi 0, %s199
      %s216 = sphi 0, %s200
    $region4: #{tpu_custom_call.1} parent=1 // loop_header_branch
      %21 = sbr.rel (%p19) target = $region8
    $region5: #{tpu_custom_call.1} parent=1 // loop_body
      %s23 = ssub.s32 %s18, 1
      %s24 = ssub.s32 %s18, 2
      %s31 = sadd.s32 1, %s26
      %p32 = scmp.ge.s32.totalorder %s31, 1
      %s33 = scalar_select %p32, 0, %s31
      %s34 = sadd.s32 1, %s25
      %s35 = scalar_select %p32, %s34, %s25
      %p36 = scmp.ge.s32.totalorder %s35, 2
      %s37 = scalar_select %p36, 0, %s35
      %s38 = ssub.s32 %s25, %s37
      %s39 = ssub.s32 %s26, %s33
      %s40 = sor.u32 %s38, %s39
      %p41 = scmp.eq.s32.totalorder %s40, 0
      %s43 = sadd.s32 %s42, 1
      %s44 = scalar_select %p41, %s42, %s43
      %p47 = pneg %p41
      %p48 = scmp.eq.s32.totalorder %s18, 1
      %p49 = por %p47, %p48
      %p50 = scmp.ne.s32.totalorder %s42, %s45
      %p51 = scmp.eq.s32.totalorder %s18, 0
      %p52 = por %p50, %p51
      %p53 = scmp.ne.s32.totalorder %s42, %s45
      %p54 = scmp.eq.s32.totalorder %s23, 1
      %p55 = por %p53, %p54
      %p56 = scmp.ne.s32.totalorder %s45, %s46
      %p57 = scmp.eq.s32.totalorder %s23, 0
      %p58 = por %p56, %p57
      %p59 = scmp.ne.s32.totalorder %s45, %s46
      %p60 = scmp.eq.s32.totalorder %s24, 1
      %p61 = por %p59, %p60
      %p63 = scmp.ne.s32.totalorder %s46, %s62
      %p64 = scmp.eq.s32.totalorder %s24, 0
      %p65 = por %p63, %p64
      %s67 = sadd.s32 %s66, 1
      %p70 = scmp.eq.s32.totalorder %s18, 1
      %p71 = scmp.ne.s32.totalorder %s66, %s68
      %p72 = scmp.eq.s32.totalorder %s18, 0
      %p73 = por %p71, %p72
      %p74 = scmp.ne.s32.totalorder %s66, %s68
      %p75 = scmp.eq.s32.totalorder %s23, 1
      %p76 = por %p74, %p75
      %p77 = scmp.ne.s32.totalorder %s68, %s69
      %p78 = scmp.eq.s32.totalorder %s23, 0
      %p79 = por %p77, %p78
      %p80 = scmp.ne.s32.totalorder %s68, %s69
      %p81 = scmp.eq.s32.totalorder %s24, 1
      %p82 = por %p80, %p81
      %p84 = scmp.ne.s32.totalorder %s69, %s83
      %p85 = scmp.eq.s32.totalorder %s24, 0
      %p86 = por %p84, %p85
      %s88 = sadd.s32 %s87, 1
      %p91 = scmp.eq.s32.totalorder %s18, 1
      %p92 = scmp.ne.s32.totalorder %s87, %s89
      %p93 = scmp.eq.s32.totalorder %s18, 0
      %p94 = por %p92, %p93
      %p95 = scmp.ne.s32.totalorder %s87, %s89
      %p96 = scmp.eq.s32.totalorder %s23, 1
      %p97 = por %p95, %p96
      %p98 = scmp.ne.s32.totalorder %s89, %s90
      %p99 = scmp.eq.s32.totalorder %s23, 0
      %p100 = por %p98, %p99
      %p101 = scmp.ne.s32.totalorder %s89, %s90
      %p102 = scmp.eq.s32.totalorder %s24, 1
      %p103 = por %p101, %p102
      %p105 = scmp.ne.s32.totalorder %s90, %s104
      %p106 = scmp.eq.s32.totalorder %s24, 0
      %p107 = por %p105, %p106
      %s109 = sadd.s32 %s108, 1
      %p112 = scmp.eq.s32.totalorder %s18, 1
      %p113 = scmp.ne.s32.totalorder %s108, %s110
      %p114 = scmp.eq.s32.totalorder %s18, 0
      %p115 = por %p113, %p114
      %p116 = scmp.ne.s32.totalorder %s108, %s110
      %p117 = scmp.eq.s32.totalorder %s23, 1
      %p118 = por %p116, %p117
      %p119 = scmp.ne.s32.totalorder %s110, %s111
      %p120 = scmp.eq.s32.totalorder %s23, 0
      %p121 = por %p119, %p120
      %p122 = scmp.ne.s32.totalorder %s110, %s111
      %p123 = scmp.eq.s32.totalorder %s24, 1
      %p124 = por %p122, %p123
      %p126 = scmp.ne.s32.totalorder %s111, %s125
      %p127 = scmp.eq.s32.totalorder %s24, 0
      %p128 = por %p126, %p127
      %s130 = sadd.s32 %s129, 1
      %p133 = scmp.eq.s32.totalorder %s18, 1
      %p134 = scmp.ne.s32.totalorder %s129, %s131
      %p135 = scmp.eq.s32.totalorder %s18, 0
      %p136 = por %p134, %p135
      %p137 = scmp.ne.s32.totalorder %s129, %s131
      %p138 = scmp.eq.s32.totalorder %s23, 1
      %p139 = por %p137, %p138
      %p140 = scmp.ne.s32.totalorder %s131, %s132
      %p141 = scmp.eq.s32.totalorder %s23, 0
      %p142 = por %p140, %p141
      %p143 = scmp.ne.s32.totalorder %s131, %s132
      %p144 = scmp.eq.s32.totalorder %s24, 1
      %p145 = por %p143, %p144
      %p147 = scmp.ne.s32.totalorder %s132, %s146
      %p148 = scmp.eq.s32.totalorder %s24, 0
      %p149 = por %p147, %p148
      %s151 = sadd.s32 %s150, 1
      %p154 = scmp.eq.s32.totalorder %s18, 1
      %p155 = scmp.ne.s32.totalorder %s150, %s152
      %p156 = scmp.eq.s32.totalorder %s18, 0
      %p157 = por %p155, %p156
      %p158 = scmp.ne.s32.totalorder %s150, %s152
      %p159 = scmp.eq.s32.totalorder %s23, 1
      %p160 = por %p158, %p159
      %p161 = scmp.ne.s32.totalorder %s152, %s153
      %p162 = scmp.eq.s32.totalorder %s23, 0
      %p163 = por %p161, %p162
      %p164 = scmp.ne.s32.totalorder %s152, %s153
      %p165 = scmp.eq.s32.totalorder %s24, 1
      %p166 = por %p164, %p165
      %p168 = scmp.ne.s32.totalorder %s153, %s167
      %p169 = scmp.eq.s32.totalorder %s24, 0
      %p170 = por %p168, %p169
      %s172 = sadd.s32 %s171, 1
      %p175 = scmp.eq.s32.totalorder %s18, 1
      %p176 = scmp.ne.s32.totalorder %s171, %s173
      %p177 = scmp.eq.s32.totalorder %s18, 0
      %p178 = por %p176, %p177
      %p179 = scmp.ne.s32.totalorder %s171, %s173
      %p180 = scmp.eq.s32.totalorder %s23, 1
      %p181 = por %p179, %p180
      %p182 = scmp.ne.s32.totalorder %s173, %s174
      %p183 = scmp.eq.s32.totalorder %s23, 0
      %p184 = por %p182, %p183
      %p185 = scmp.ne.s32.totalorder %s173, %s174
      %p186 = scmp.eq.s32.totalorder %s24, 1
      %p187 = por %p185, %p186
      %p189 = scmp.ne.s32.totalorder %s174, %s188
      %p190 = scmp.eq.s32.totalorder %s24, 0
      %p191 = por %p189, %p190
      %s192 = ssub.s32 %s25, %s37
      %s193 = ssub.s32 %s26, %s33
      %s194 = sor.u32 %s192, %s193
      %p195 = scmp.eq.s32.totalorder %s194, 0
      %s197 = sadd.s32 %s196, 1
      %s198 = scalar_select %p195, %s196, %s197
      %p201 = pneg %p195
      %p202 = scmp.eq.s32.totalorder %s18, 1
      %p203 = por %p201, %p202
      %p204 = scmp.ne.s32.totalorder %s196, %s199
      %p205 = scmp.eq.s32.totalorder %s18, 0
      %p206 = por %p204, %p205
      %p207 = scmp.ne.s32.totalorder %s196, %s199
      %p208 = scmp.eq.s32.totalorder %s23, 1
      %p209 = por %p207, %p208
      %p210 = scmp.ne.s32.totalorder %s199, %s200
      %p211 = scmp.eq.s32.totalorder %s23, 0
      %p212 = por %p210, %p211
      %p213 = scmp.ne.s32.totalorder %s199, %s200
      %p214 = scmp.eq.s32.totalorder %s24, 1
      %p215 = por %p213, %p214
      %p217 = scmp.ne.s32.totalorder %s200, %s216
      %p218 = scmp.eq.s32.totalorder %s24, 0
      %p219 = por %p217, %p218
      %p220 = scmp.le.s32.totalorder 1, %s18
      %p221 = scmp.lt.s32.totalorder %s18, 3
      %p222 = pnand %p220, %p221
      %p223 = pneg %p222
      // Predicated region
      $region9: #{tpu_custom_call.1} parent=5 // pred_check
        _
      $region10: #{tpu_custom_call.1} parent=5 // pred_check_branch
        %225 = sbr.rel (%p222) target = $region12
      $region11: #{tpu_custom_call.1} parent=5 // pred_region
        %s226 = ssub.s32 %s18, 1
        // Predicated region
        $region13: #{tpu_custom_call.1} parent=11 // pred_check
          %p227 = pneg %p79
        $region14: #{tpu_custom_call.1} parent=11 // pred_check_branch
          %229 = sbr.rel (%p227) target = $region16
        $region15: #{tpu_custom_call.1} parent=11 // pred_region
          _
        $region16: #{tpu_custom_call.1} parent=11 // pred_fallthru
          _
        // Predicated region
        $region17: #{tpu_custom_call.1} parent=11 // pred_check
          %p230 = pneg %p100
        $region18: #{tpu_custom_call.1} parent=11 // pred_check_branch
          %232 = sbr.rel (%p230) target = $region20
        $region19: #{tpu_custom_call.1} parent=11 // pred_region
          _
        $region20: #{tpu_custom_call.1} parent=11 // pred_fallthru
          _
        // Predicated region
        $region21: #{tpu_custom_call.1} parent=11 // pred_check
          %p233 = pneg %p121
        $region22: #{tpu_custom_call.1} parent=11 // pred_check_branch
          %235 = sbr.rel (%p233) target = $region24
        $region23: #{tpu_custom_call.1} parent=11 // pred_region
          _
        $region24: #{tpu_custom_call.1} parent=11 // pred_fallthru
          _
        // Predicated region
        $region25: #{tpu_custom_call.1} parent=11 // pred_check
          %p236 = pneg %p142
        $region26: #{tpu_custom_call.1} parent=11 // pred_check_branch
          %238 = sbr.rel (%p236) target = $region28
        $region27: #{tpu_custom_call.1} parent=11 // pred_region
          _
        $region28: #{tpu_custom_call.1} parent=11 // pred_fallthru
          _
        // Predicated region
        $region29: #{tpu_custom_call.1} parent=11 // pred_check
          %p239 = pneg %p163
        $region30: #{tpu_custom_call.1} parent=11 // pred_check_branch
          %241 = sbr.rel (%p239) target = $region32
        $region31: #{tpu_custom_call.1} parent=11 // pred_region
          _
        $region32: #{tpu_custom_call.1} parent=11 // pred_fallthru
          _
        // Predicated region
        $region33: #{tpu_custom_call.1} parent=11 // pred_check
          %p242 = pneg %p184
        $region34: #{tpu_custom_call.1} parent=11 // pred_check_branch
          %244 = sbr.rel (%p242) target = $region36
        $region35: #{tpu_custom_call.1} parent=11 // pred_region
          _
        $region36: #{tpu_custom_call.1} parent=11 // pred_fallthru
          _
      $region12: #{tpu_custom_call.1} parent=5 // pred_fallthru
        _
      %p245 = scmp.lt.s32.totalorder %s18, 2
      // Predicated region
      $region37: #{tpu_custom_call.1} parent=5 // pred_check
        %p246 = pneg %p245
      $region38: #{tpu_custom_call.1} parent=5 // pred_check_branch
        %248 = sbr.rel (%p246) target = $region40
      $region39: #{tpu_custom_call.1} parent=5 // pred_region
        // Predicated region
        $region41: #{tpu_custom_call.1} parent=39 // pred_check
          %p249 = pneg %p52
        $region42: #{tpu_custom_call.1} parent=39 // pred_check_branch
          %251 = sbr.rel (%p249) target = $region44
        $region43: #{tpu_custom_call.1} parent=39 // pred_region
          %s252 = smul.u32 2, %s26
          %p253 = scmp.lt.s32.totalorder %s25, 1
          %s254 = scalar_select %p253, %s25, 1
          %p255 = scmp.lt.s32.totalorder %s252, 1
          %s256 = scalar_select %p255, %s252, 1
          %s257 = smul.addr %s254, 2
          %s258 = sadd.s32 %s256, %s257
          %s259 = smul.addr %s258, 2
          %s260 = scalar_lea.vmem %s0, %s259
          %s261 = smul.u32 2, %s26
        $region44: #{tpu_custom_call.1} parent=39 // pred_fallthru
          _
      $region40: #{tpu_custom_call.1} parent=5 // pred_fallthru
        _
      %p262 = scmp.le.s32.totalorder 1, %s18
      %p263 = scmp.lt.s32.totalorder %s18, 3
      %p264 = pnand %p262, %p263
      %p265 = pneg %p264
      // Predicated region
      $region45: #{tpu_custom_call.1} parent=5 // pred_check
        _
      $region46: #{tpu_custom_call.1} parent=5 // pred_check_branch
        %267 = sbr.rel (%p264) target = $region48
      $region47: #{tpu_custom_call.1} parent=5 // pred_region
        %s268 = ssub.s32 %s18, 1
        %s269 = smul.u32 2, %s28
        %p270 = scmp.lt.s32.totalorder %s27, 1
        %s271 = scalar_select %p270, %s27, 1
        %p272 = scmp.lt.s32.totalorder %s269, 1
        %s273 = scalar_select %p272, %s269, 1
        %s274 = smul.addr %s271, 2
        %s275 = sadd.s32 %s273, %s274
        %s276 = smul.addr %s275, 2
        %s277 = scalar_lea.vmem %s0, %s276
        %p278 = pneg %p58
        %p279 = pneg %p55
        %p280 = pneg %p79
        %p281 = pneg %p76
        %p282 = pneg %p100
        %p283 = pneg %p97
        %p284 = pneg %p121
        %p285 = pneg %p118
        %p286 = pneg %p142
        %p287 = pneg %p139
        %p288 = pneg %p163
        %p289 = pneg %p160
        %p290 = pneg %p184
        %p291 = pneg %p181
        %p292 = pneg %p212
        %p293 = pneg %p209
        %s294 = sand.u32 %s199, 1
        %s295 = scalar_lea.sflag [#allocation4], %s294
        %s296 = sand.u32 %s199, 1
        %s297 = smul.addr %s296, 2
        %s298 = scalar_lea.vmem [#allocation3], %s297
        %s299 = smul.u32 2, %s28
        %p300 = scmp.lt.s32.totalorder %s27, 1
        %s301 = scalar_select %p300, %s27, 1
        %p302 = scmp.lt.s32.totalorder %s299, 1
        %s303 = scalar_select %p302, %s299, 1
        %s304 = smul.addr %s301, 2
        %s305 = sadd.s32 %s303, %s304
        %s306 = smul.addr %s305, 2
        %s307 = scalar_lea.vmem %s0, %s306
        %s308 = smul.u32 2, %s28
        %s309 = smul.u32 2, %s28
        %v311 = vld [vmem:[%s307] sm:$0xf]
        %v312 = vld [vmem:[%s1] sm:$0xf]
        %v313 = vld [vmem:[%s1 + $0x4] sm:$0xf]
        %v314 = vld [vmem:[%s1 + $0x8] sm:$0xf]
        %v315 = vld [vmem:[%s1 + $0xc] sm:$0xf]
        %v316 = vld [vmem:[%s1 + $0x10] sm:$0xf]
        %v317 = vld [vmem:[%s1 + $0x14] sm:$0xf]
        %v318 = vld [vmem:[%s1 + $0x18] sm:$0xf]
        %v319 = vld [vmem:[%s1 + $0x1c] sm:$0xf]
        %v320 = vld [vmem:[%s1 + $0x20] sm:$0xf]
        %v321 = vld [vmem:[%s1 + $0x24] sm:$0xf]
        %v322 = vld [vmem:[%s1 + $0x28] sm:$0xf]
        %v323 = vld [vmem:[%s1 + $0x2c] sm:$0xf]
        %v324 = vld [vmem:[%s1 + $0x30] sm:$0xf]
        %v325 = vld [vmem:[%s1 + $0x34] sm:$0xf]
        %v326 = vld [vmem:[%s1 + $0x38] sm:$0xf]
        %v327 = vld [vmem:[%s1 + $0x3c] sm:$0xf]
        %v328 = vld [vmem:[%s1 + $0x40] sm:$0xf]
        %v329 = vld [vmem:[%s1 + $0x44] sm:$0xf]
        %v330 = vld [vmem:[%s1 + $0x48] sm:$0xf]
        %v331 = vld [vmem:[%s1 + $0x4c] sm:$0xf]
        %v332 = vld [vmem:[%s1 + $0x50] sm:$0xf]
        %v333 = vld [vmem:[%s1 + $0x54] sm:$0xf]
        %v334 = vld [vmem:[%s1 + $0x58] sm:$0xf]
        %v335 = vld [vmem:[%s1 + $0x5c] sm:$0xf]
        %v336 = vld [vmem:[%s1 + $0x60] sm:$0xf]
        %v337 = vld [vmem:[%s1 + $0x64] sm:$0xf]
        %v338 = vld [vmem:[%s1 + $0x68] sm:$0xf]
        %v339 = vld [vmem:[%s1 + $0x6c] sm:$0xf]
        %v340 = vld [vmem:[%s1 + $0x70] sm:$0xf]
        %v341 = vld [vmem:[%s1 + $0x74] sm:$0xf]
        %v342 = vld [vmem:[%s1 + $0x78] sm:$0xf]
        %v343 = vld [vmem:[%s1 + $0x7c] sm:$0xf]
        %v344 = vld [vmem:[%s2] sm:$0xff]
        %v345 = vld [vmem:[%s2 + $0x8] sm:$0xff]
        %v346 = vld [vmem:[%s2 + $0x10] sm:$0xff]
        %v347 = vld [vmem:[%s2 + $0x18] sm:$0xff]
        %v348 = vld [vmem:[%s2 + $0x20] sm:$0xff]
        %v349 = vld [vmem:[%s2 + $0x28] sm:$0xff]
        %v350 = vld [vmem:[%s2 + $0x30] sm:$0xff]
        %v351 = vld [vmem:[%s2 + $0x38] sm:$0xff]
        %v352 = vld [vmem:[%s2 + $0x40] sm:$0xff]
        %v353 = vld [vmem:[%s2 + $0x48] sm:$0xff]
        %v354 = vld [vmem:[%s2 + $0x50] sm:$0xff]
        %v355 = vld [vmem:[%s2 + $0x58] sm:$0xff]
        %v356 = vld [vmem:[%s2 + $0x60] sm:$0xff]
        %v357 = vld [vmem:[%s2 + $0x68] sm:$0xff]
        %v358 = vld [vmem:[%s2 + $0x70] sm:$0xff]
        %v359 = vld [vmem:[%s2 + $0x78] sm:$0xff]
        %v360 = vld [vmem:[%s2 + $0x80] sm:$0xff]
        %v361 = vld [vmem:[%s2 + $0x88] sm:$0xff]
        %v362 = vld [vmem:[%s2 + $0x90] sm:$0xff]
        %v363 = vld [vmem:[%s2 + $0x98] sm:$0xff]
        %v364 = vld [vmem:[%s2 + $0xa0] sm:$0xff]
        %v365 = vld [vmem:[%s2 + $0xa8] sm:$0xff]
        %v366 = vld [vmem:[%s2 + $0xb0] sm:$0xff]
        %v367 = vld [vmem:[%s2 + $0xb8] sm:$0xff]
        %v368 = vld [vmem:[%s2 + $0xc0] sm:$0xff]
        %v369 = vld [vmem:[%s2 + $0xc8] sm:$0xff]
        %v370 = vld [vmem:[%s2 + $0xd0] sm:$0xff]
        %v371 = vld [vmem:[%s2 + $0xd8] sm:$0xff]
        %v372 = vld [vmem:[%s2 + $0xe0] sm:$0xff]
        %v373 = vld [vmem:[%s2 + $0xe8] sm:$0xff]
        %v374 = vld [vmem:[%s2 + $0xf0] sm:$0xff]
        %v375 = vld [vmem:[%s2 + $0xf8] sm:$0xff]
        %377 = vset.pattern.permute.xlu0 0
        %378 = vperm.xlu0 %377, %v344
        %v379 = vpop.permute.xlu0 %378
        %382 = vset.pattern.permute.xlu0 0
        %383 = vperm.xlu0 %382, %v345
        %v384 = vpop.permute.xlu0 %383
        %387 = vset.pattern.permute.xlu0 0
        %388 = vperm.xlu0 %387, %v346
        %v389 = vpop.permute.xlu0 %388
        %392 = vset.pattern.permute.xlu0 0
        %393 = vperm.xlu0 %392, %v347
        %v394 = vpop.permute.xlu0 %393
        %397 = vset.pattern.permute.xlu0 0
        %398 = vperm.xlu0 %397, %v348
        %v399 = vpop.permute.xlu0 %398
        %402 = vset.pattern.permute.xlu0 0
        %403 = vperm.xlu0 %402, %v349
        %v404 = vpop.permute.xlu0 %403
        %407 = vset.pattern.permute.xlu0 0
        %408 = vperm.xlu0 %407, %v350
        %v409 = vpop.permute.xlu0 %408
        %412 = vset.pattern.permute.xlu0 0
        %413 = vperm.xlu0 %412, %v351
        %v414 = vpop.permute.xlu0 %413
        %417 = vset.pattern.permute.xlu0 0
        %418 = vperm.xlu0 %417, %v352
        %v419 = vpop.permute.xlu0 %418
        %422 = vset.pattern.permute.xlu0 0
        %423 = vperm.xlu0 %422, %v353
        %v424 = vpop.permute.xlu0 %423
        %427 = vset.pattern.permute.xlu0 0
        %428 = vperm.xlu0 %427, %v354
        %v429 = vpop.permute.xlu0 %428
        %432 = vset.pattern.permute.xlu0 0
        %433 = vperm.xlu0 %432, %v355
        %v434 = vpop.permute.xlu0 %433
        %437 = vset.pattern.permute.xlu0 0
        %438 = vperm.xlu0 %437, %v356
        %v439 = vpop.permute.xlu0 %438
        %442 = vset.pattern.permute.xlu0 0
        %443 = vperm.xlu0 %442, %v357
        %v444 = vpop.permute.xlu0 %443
        %447 = vset.pattern.permute.xlu0 0
        %448 = vperm.xlu0 %447, %v358
        %v449 = vpop.permute.xlu0 %448
        %452 = vset.pattern.permute.xlu0 0
        %453 = vperm.xlu0 %452, %v359
        %v454 = vpop.permute.xlu0 %453
        %457 = vset.pattern.permute.xlu0 0
        %458 = vperm.xlu0 %457, %v360
        %v459 = vpop.permute.xlu0 %458
        %462 = vset.pattern.permute.xlu0 0
        %463 = vperm.xlu0 %462, %v361
        %v464 = vpop.permute.xlu0 %463
        %467 = vset.pattern.permute.xlu0 0
        %468 = vperm.xlu0 %467, %v362
        %v469 = vpop.permute.xlu0 %468
        %472 = vset.pattern.permute.xlu0 0
        %473 = vperm.xlu0 %472, %v363
        %v474 = vpop.permute.xlu0 %473
        %477 = vset.pattern.permute.xlu0 0
        %478 = vperm.xlu0 %477, %v364
        %v479 = vpop.permute.xlu0 %478
        %482 = vset.pattern.permute.xlu0 0
        %483 = vperm.xlu0 %482, %v365
        %v484 = vpop.permute.xlu0 %483
        %487 = vset.pattern.permute.xlu0 0
        %488 = vperm.xlu0 %487, %v366
        %v489 = vpop.permute.xlu0 %488
        %492 = vset.pattern.permute.xlu0 0
        %493 = vperm.xlu0 %492, %v367
        %v494 = vpop.permute.xlu0 %493
        %497 = vset.pattern.permute.xlu0 0
        %498 = vperm.xlu0 %497, %v368
        %v499 = vpop.permute.xlu0 %498
        %502 = vset.pattern.permute.xlu0 0
        %503 = vperm.xlu0 %502, %v369
        %v504 = vpop.permute.xlu0 %503
        %507 = vset.pattern.permute.xlu0 0
        %508 = vperm.xlu0 %507, %v370
        %v509 = vpop.permute.xlu0 %508
        %512 = vset.pattern.permute.xlu0 0
        %513 = vperm.xlu0 %512, %v371
        %v514 = vpop.permute.xlu0 %513
        %517 = vset.pattern.permute.xlu0 0
        %518 = vperm.xlu0 %517, %v372
        %v519 = vpop.permute.xlu0 %518
        %522 = vset.pattern.permute.xlu0 0
        %523 = vperm.xlu0 %522, %v373
        %v524 = vpop.permute.xlu0 %523
        %527 = vset.pattern.permute.xlu0 0
        %528 = vperm.xlu0 %527, %v374
        %v529 = vpop.permute.xlu0 %528
        %532 = vset.pattern.permute.xlu0 0
        %533 = vperm.xlu0 %532, %v375
        %v534 = vpop.permute.xlu0 %533
        %v568 = vunpack.c.l.b16 %v312
        %v569 = vunpack.c.l.b16 %v313
        %v570 = vunpack.c.l.b16 %v314
        %v571 = vunpack.c.l.b16 %v315
        %v572 = vunpack.c.l.b16 %v316
        %v573 = vunpack.c.l.b16 %v317
        %v574 = vunpack.c.l.b16 %v318
        %v575 = vunpack.c.l.b16 %v319
        %v576 = vunpack.c.l.b16 %v320
        %v577 = vunpack.c.l.b16 %v321
        %v578 = vunpack.c.l.b16 %v322
        %v579 = vunpack.c.l.b16 %v323
        %v580 = vunpack.c.l.b16 %v324
        %v581 = vunpack.c.l.b16 %v325
        %v582 = vunpack.c.l.b16 %v326
        %v583 = vunpack.c.l.b16 %v327
        %v584 = vunpack.c.l.b16 %v328
        %v585 = vunpack.c.l.b16 %v329
        %v586 = vunpack.c.l.b16 %v330
        %v587 = vunpack.c.l.b16 %v331
        %v588 = vunpack.c.l.b16 %v332
        %v589 = vunpack.c.l.b16 %v333
        %v590 = vunpack.c.l.b16 %v334
        %v591 = vunpack.c.l.b16 %v335
        %v592 = vunpack.c.l.b16 %v336
        %v593 = vunpack.c.l.b16 %v337
        %v594 = vunpack.c.l.b16 %v338
        %v595 = vunpack.c.l.b16 %v339
        %v596 = vunpack.c.l.b16 %v340
        %v597 = vunpack.c.l.b16 %v341
        %v598 = vunpack.c.l.b16 %v342
        %v599 = vunpack.c.l.b16 %v343
        %v600 = vpack.c.b16 %v569, %v568
        %v601 = vpack.c.b16 %v571, %v570
        %v602 = vpack.c.b16 %v573, %v572
        %v603 = vpack.c.b16 %v575, %v574
        %v604 = vpack.c.b16 %v577, %v576
        %v605 = vpack.c.b16 %v579, %v578
        %v606 = vpack.c.b16 %v581, %v580
        %v607 = vpack.c.b16 %v583, %v582
        %v608 = vpack.c.b16 %v585, %v584
        %v609 = vpack.c.b16 %v587, %v586
        %v610 = vpack.c.b16 %v589, %v588
        %v611 = vpack.c.b16 %v591, %v590
        %v612 = vpack.c.b16 %v593, %v592
        %v613 = vpack.c.b16 %v595, %v594
        %v614 = vpack.c.b16 %v597, %v596
        %v615 = vpack.c.b16 %v599, %v598
        %v618 = vunpack.c.l.s4 1983009808
        %v619 = vunpack.c.0.s8 %v618
        %v620 = vlaneseq
        %v621 = vshrl.u32 %v620, 7
        %v622 = vsub.s32 %v619, %v621
        %v623 = vrot.slane %v311, %v622
        %v624 = vcombine.high %v623, %v623
        %vm625 = vcmask 31744
        %v627 = vsel %vm625, %v600, 0
        %v630 = vsel %vm625, %v601, 0
        %v633 = vsel %vm625, %v602, 0
        %v636 = vsel %vm625, %v603, 0
        %v639 = vsel %vm625, %v604, 0
        %v642 = vsel %vm625, %v605, 0
        %v645 = vsel %vm625, %v606, 0
        %v648 = vsel %vm625, %v607, 0
        %v651 = vsel %vm625, %v608, 0
        %v654 = vsel %vm625, %v609, 0
        %v657 = vsel %vm625, %v610, 0
        %v660 = vsel %vm625, %v611, 0
        %v663 = vsel %vm625, %v612, 0
        %v666 = vsel %vm625, %v613, 0
        %v669 = vsel %vm625, %v614, 0
        %v672 = vsel %vm625, %v615, 0
        %vm674 = vcmask 1041408
        %v676 = vsel %vm674, %v623, 0
        %v679 = vsel %vm674, %v624, 0
        %681 = vmatprep.subr.bf16.mxu0 %v679
        %682 = vmatpush1.bf16.msra.mxu0 %v676
        %683 = vmatprep.subr.bf16.mxu0 0
        %684 = vmatpush1.bf16.msra.mxu0 0
        %685 = vmatprep.subr.bf16.mxu0 0
        %686 = vmatpush1.bf16.msra.mxu0 0
        %687 = vmatprep.subr.bf16.mxu0 0
        %688 = vmatpush1.bf16.msra.mxu0 0
        %689 = vmatprep.subr.bf16.mxu0 0
        %690 = vmatpush1.bf16.msra.mxu0 0
        %691 = vmatprep.subr.bf16.mxu0 0
        %692 = vmatpush1.bf16.msra.mxu0 0
        %693 = vmatprep.subr.bf16.mxu0 0
        %694 = vmatpush1.bf16.msra.mxu0 0
        %695 = vmatprep.subr.bf16.mxu0 0
        %696 = vmatpush1.bf16.msra.mxu0 0
        %697 = vmatprep.subr.bf16.mxu0 0
        %698 = vmatpush1.bf16.msra.mxu0 0
        %699 = vmatprep.subr.bf16.mxu0 0
        %700 = vmatpush1.bf16.msra.mxu0 0
        %701 = vmatprep.subr.bf16.mxu0 0
        %702 = vmatpush1.bf16.msra.mxu0 0
        %703 = vmatprep.subr.bf16.mxu0 0
        %704 = vmatpush1.bf16.msra.mxu0 0
        %705 = vmatprep.subr.bf16.mxu0 0
        %706 = vmatpush1.bf16.msra.mxu0 0
        %707 = vmatprep.subr.bf16.mxu0 0
        %708 = vmatpush1.bf16.msra.mxu0 0
        %709 = vmatprep.subr.bf16.mxu0 0
        %710 = vmatpush1.bf16.msra.mxu0 0
        %711 = vmatprep.subr.bf16.mxu0 0
        %712 = vmatpush1.bf16.msra.mxu0 0
        %713 = vmatprep.mubr.bf16.mxu0 0
        %714 = vmatmul.mubr.bf16.gmra.mrb[0].mxu0 %v627
        %v715 = vpop.f32.mrb[0].mxu0
        %v716 = vadd.f32 %v379, %v715
        %v717 = vpop.f32.mrb[0].mxu0
        %v718 = vadd.f32 %v379, %v717
        %v719 = vpop.f32.mrb[0].mxu0
        %v720 = vadd.f32 %v384, %v719
        %v721 = vpop.f32.mrb[0].mxu0
        %v722 = vadd.f32 %v384, %v721
        %723 = vmatprep.mubr.bf16.mxu0 0
        %724 = vmatmul.mubr.bf16.gmra.mrb[0].mxu0 %v630
        %v725 = vpop.f32.mrb[0].mxu0
        %v726 = vadd.f32 %v389, %v725
        %v727 = vpop.f32.mrb[0].mxu0
        %v728 = vadd.f32 %v389, %v727
        %v729 = vpop.f32.mrb[0].mxu0
        %v730 = vadd.f32 %v394, %v729
        %v731 = vpop.f32.mrb[0].mxu0
        %v732 = vadd.f32 %v394, %v731
        %733 = vmatprep.mubr.bf16.mxu0 0
        %734 = vmatmul.mubr.bf16.gmra.mrb[0].mxu0 %v633
        %v735 = vpop.f32.mrb[0].mxu0
        %v736 = vadd.f32 %v399, %v735
        %v737 = vpop.f32.mrb[0].mxu0
        %v738 = vadd.f32 %v399, %v737
        %v739 = vpop.f32.mrb[0].mxu0
        %v740 = vadd.f32 %v404, %v739
        %v741 = vpop.f32.mrb[0].mxu0
        %v742 = vadd.f32 %v404, %v741
        %743 = vmatprep.mubr.bf16.mxu0 0
        %744 = vmatmul.mubr.bf16.gmra.mrb[0].mxu0 %v636
        %v745 = vpop.f32.mrb[0].mxu0
        %v746 = vadd.f32 %v409, %v745
        %v747 = vpop.f32.mrb[0].mxu0
        %v748 = vadd.f32 %v409, %v747
        %v749 = vpop.f32.mrb[0].mxu0
        %v750 = vadd.f32 %v414, %v749
        %v751 = vpop.f32.mrb[0].mxu0
        %v752 = vadd.f32 %v414, %v751
        %753 = vmatprep.mubr.bf16.mxu0 0
        %754 = vmatmul.mubr.bf16.gmra.mrb[0].mxu0 %v639
        %v755 = vpop.f32.mrb[0].mxu0
        %v756 = vadd.f32 %v419, %v755
        %v757 = vpop.f32.mrb[0].mxu0
        %v758 = vadd.f32 %v419, %v757
        %v759 = vpop.f32.mrb[0].mxu0
        %v760 = vadd.f32 %v424, %v759
        %v761 = vpop.f32.mrb[0].mxu0
        %v762 = vadd.f32 %v424, %v761
        %763 = vmatprep.mubr.bf16.mxu0 0
        %764 = vmatmul.mubr.bf16.gmra.mrb[0].mxu0 %v642
        %v765 = vpop.f32.mrb[0].mxu0
        %v766 = vadd.f32 %v429, %v765
        %v767 = vpop.f32.mrb[0].mxu0
        %v768 = vadd.f32 %v429, %v767
        %v769 = vpop.f32.mrb[0].mxu0
        %v770 = vadd.f32 %v434, %v769
        %v771 = vpop.f32.mrb[0].mxu0
        %v772 = vadd.f32 %v434, %v771
        %773 = vmatprep.mubr.bf16.mxu0 0
        %774 = vmatmul.mubr.bf16.gmra.mrb[0].mxu0 %v645
        %v775 = vpop.f32.mrb[0].mxu0
        %v776 = vadd.f32 %v439, %v775
        %v777 = vpop.f32.mrb[0].mxu0
        %v778 = vadd.f32 %v439, %v777
        %v779 = vpop.f32.mrb[0].mxu0
        %v780 = vadd.f32 %v444, %v779
        %v781 = vpop.f32.mrb[0].mxu0
        %v782 = vadd.f32 %v444, %v781
        %783 = vmatprep.mubr.bf16.mxu0 0
        %784 = vmatmul.mubr.bf16.gmra.mrb[0].mxu0 %v648
        %v785 = vpop.f32.mrb[0].mxu0
        %v786 = vadd.f32 %v449, %v785
        %v787 = vpop.f32.mrb[0].mxu0
        %v788 = vadd.f32 %v449, %v787
        %v789 = vpop.f32.mrb[0].mxu0
        %v790 = vadd.f32 %v454, %v789
        %v791 = vpop.f32.mrb[0].mxu0
        %v792 = vadd.f32 %v454, %v791
        %793 = vmatprep.mubr.bf16.mxu0 0
        %794 = vmatmul.mubr.bf16.gmra.mrb[0].mxu0 %v651
        %v795 = vpop.f32.mrb[0].mxu0
        %v796 = vadd.f32 %v459, %v795
        %v797 = vpop.f32.mrb[0].mxu0
        %v798 = vadd.f32 %v459, %v797
        %v799 = vpop.f32.mrb[0].mxu0
        %v800 = vadd.f32 %v464, %v799
        %v801 = vpop.f32.mrb[0].mxu0
        %v802 = vadd.f32 %v464, %v801
        %803 = vmatprep.mubr.bf16.mxu0 0
        %804 = vmatmul.mubr.bf16.gmra.mrb[0].mxu0 %v654
        %v805 = vpop.f32.mrb[0].mxu0
        %v806 = vadd.f32 %v469, %v805
        %v807 = vpop.f32.mrb[0].mxu0
        %v808 = vadd.f32 %v469, %v807
        %v809 = vpop.f32.mrb[0].mxu0
        %v810 = vadd.f32 %v474, %v809
        %v811 = vpop.f32.mrb[0].mxu0
        %v812 = vadd.f32 %v474, %v811
        %813 = vmatprep.mubr.bf16.mxu0 0
        %814 = vmatmul.mubr.bf16.gmra.mrb[0].mxu0 %v657
        %v815 = vpop.f32.mrb[0].mxu0
        %v816 = vadd.f32 %v479, %v815
        %v817 = vpop.f32.mrb[0].mxu0
        %v818 = vadd.f32 %v479, %v817
        %v819 = vpop.f32.mrb[0].mxu0
        %v820 = vadd.f32 %v484, %v819
        %v821 = vpop.f32.mrb[0].mxu0
        %v822 = vadd.f32 %v484, %v821
        %823 = vmatprep.mubr.bf16.mxu0 0
        %824 = vmatmul.mubr.bf16.gmra.mrb[0].mxu0 %v660
        %v825 = vpop.f32.mrb[0].mxu0
        %v826 = vadd.f32 %v489, %v825
        %v827 = vpop.f32.mrb[0].mxu0
        %v828 = vadd.f32 %v489, %v827
        %v829 = vpop.f32.mrb[0].mxu0
        %v830 = vadd.f32 %v494, %v829
        %v831 = vpop.f32.mrb[0].mxu0
        %v832 = vadd.f32 %v494, %v831
        %833 = vmatprep.mubr.bf16.mxu0 0
        %834 = vmatmul.mubr.bf16.gmra.mrb[0].mxu0 %v663
        %v835 = vpop.f32.mrb[0].mxu0
        %v836 = vadd.f32 %v499, %v835
        %v837 = vpop.f32.mrb[0].mxu0
        %v838 = vadd.f32 %v499, %v837
        %v839 = vpop.f32.mrb[0].mxu0
        %v840 = vadd.f32 %v504, %v839
        %v841 = vpop.f32.mrb[0].mxu0
        %v842 = vadd.f32 %v504, %v841
        %843 = vmatprep.mubr.bf16.mxu0 0
        %844 = vmatmul.mubr.bf16.gmra.mrb[0].mxu0 %v666
        %v845 = vpop.f32.mrb[0].mxu0
        %v846 = vadd.f32 %v509, %v845
        %v847 = vpop.f32.mrb[0].mxu0
        %v848 = vadd.f32 %v509, %v847
        %v849 = vpop.f32.mrb[0].mxu0
        %v850 = vadd.f32 %v514, %v849
        %v851 = vpop.f32.mrb[0].mxu0
        %v852 = vadd.f32 %v514, %v851
        %853 = vmatprep.mubr.bf16.mxu0 0
        %854 = vmatmul.mubr.bf16.gmra.mrb[0].mxu0 %v669
        %v855 = vpop.f32.mrb[0].mxu0
        %v856 = vadd.f32 %v519, %v855
        %v857 = vpop.f32.mrb[0].mxu0
        %v858 = vadd.f32 %v519, %v857
        %v859 = vpop.f32.mrb[0].mxu0
        %v860 = vadd.f32 %v524, %v859
        %v861 = vpop.f32.mrb[0].mxu0
        %v862 = vadd.f32 %v524, %v861
        %863 = vmatprep.mubr.bf16.mxu0 0
        %864 = vmatmul.mubr.bf16.gmra.mrb[0].mxu0 %v672
        %v865 = vpop.f32.mrb[0].mxu0
        %v866 = vadd.f32 %v529, %v865
        %v867 = vpop.f32.mrb[0].mxu0
        %v868 = vadd.f32 %v529, %v867
        %v869 = vpop.f32.mrb[0].mxu0
        %v870 = vadd.f32 %v534, %v869
        %v871 = vpop.f32.mrb[0].mxu0
        %v872 = vadd.f32 %v534, %v871
        %873 = vdwg.mxu0
        %vm874 = vcmp.gt.f32.partialorder %v716, 0.0
        %vm875 = vcmp.gt.f32.partialorder %v718, 0.0
        %vm876 = vcmp.gt.f32.partialorder %v720, 0.0
        %vm877 = vcmp.gt.f32.partialorder %v722, 0.0
        %vm878 = vcmp.gt.f32.partialorder %v726, 0.0
        %vm879 = vcmp.gt.f32.partialorder %v728, 0.0
        %vm880 = vcmp.gt.f32.partialorder %v730, 0.0
        %vm881 = vcmp.gt.f32.partialorder %v732, 0.0
        %vm882 = vcmp.gt.f32.partialorder %v736, 0.0
        %vm883 = vcmp.gt.f32.partialorder %v738, 0.0
        %vm884 = vcmp.gt.f32.partialorder %v740, 0.0
        %vm885 = vcmp.gt.f32.partialorder %v742, 0.0
        %vm886 = vcmp.gt.f32.partialorder %v746, 0.0
        %vm887 = vcmp.gt.f32.partialorder %v748, 0.0
        %vm888 = vcmp.gt.f32.partialorder %v750, 0.0
        %vm889 = vcmp.gt.f32.partialorder %v752, 0.0
        %vm890 = vcmp.gt.f32.partialorder %v756, 0.0
        %vm891 = vcmp.gt.f32.partialorder %v758, 0.0
        %vm892 = vcmp.gt.f32.partialorder %v760, 0.0
        %vm893 = vcmp.gt.f32.partialorder %v762, 0.0
        %vm894 = vcmp.gt.f32.partialorder %v766, 0.0
        %vm895 = vcmp.gt.f32.partialorder %v768, 0.0
        %vm896 = vcmp.gt.f32.partialorder %v770, 0.0
        %vm897 = vcmp.gt.f32.partialorder %v772, 0.0
        %vm898 = vcmp.gt.f32.partialorder %v776, 0.0
        %vm899 = vcmp.gt.f32.partialorder %v778, 0.0
        %vm900 = vcmp.gt.f32.partialorder %v780, 0.0
        %vm901 = vcmp.gt.f32.partialorder %v782, 0.0
        %vm902 = vcmp.gt.f32.partialorder %v786, 0.0
        %vm903 = vcmp.gt.f32.partialorder %v788, 0.0
        %vm904 = vcmp.gt.f32.partialorder %v790, 0.0
        %vm905 = vcmp.gt.f32.partialorder %v792, 0.0
        %vm906 = vcmp.gt.f32.partialorder %v796, 0.0
        %vm907 = vcmp.gt.f32.partialorder %v798, 0.0
        %vm908 = vcmp.gt.f32.partialorder %v800, 0.0
        %vm909 = vcmp.gt.f32.partialorder %v802, 0.0
        %vm910 = vcmp.gt.f32.partialorder %v806, 0.0
        %vm911 = vcmp.gt.f32.partialorder %v808, 0.0
        %vm912 = vcmp.gt.f32.partialorder %v810, 0.0
        %vm913 = vcmp.gt.f32.partialorder %v812, 0.0
        %vm914 = vcmp.gt.f32.partialorder %v816, 0.0
        %vm915 = vcmp.gt.f32.partialorder %v818, 0.0
        %vm916 = vcmp.gt.f32.partialorder %v820, 0.0
        %vm917 = vcmp.gt.f32.partialorder %v822, 0.0
        %vm918 = vcmp.gt.f32.partialorder %v826, 0.0
        %vm919 = vcmp.gt.f32.partialorder %v828, 0.0
        %vm920 = vcmp.gt.f32.partialorder %v830, 0.0
        %vm921 = vcmp.gt.f32.partialorder %v832, 0.0
        %vm922 = vcmp.gt.f32.partialorder %v836, 0.0
        %vm923 = vcmp.gt.f32.partialorder %v838, 0.0
        %vm924 = vcmp.gt.f32.partialorder %v840, 0.0
        %vm925 = vcmp.gt.f32.partialorder %v842, 0.0
        %vm926 = vcmp.gt.f32.partialorder %v846, 0.0
        %vm927 = vcmp.gt.f32.partialorder %v848, 0.0
        %vm928 = vcmp.gt.f32.partialorder %v850, 0.0
        %vm929 = vcmp.gt.f32.partialorder %v852, 0.0
        %vm930 = vcmp.gt.f32.partialorder %v856, 0.0
        %vm931 = vcmp.gt.f32.partialorder %v858, 0.0
        %vm932 = vcmp.gt.f32.partialorder %v860, 0.0
        %vm933 = vcmp.gt.f32.partialorder %v862, 0.0
        %vm934 = vcmp.gt.f32.partialorder %v866, 0.0
        %vm935 = vcmp.gt.f32.partialorder %v868, 0.0
        %vm936 = vcmp.gt.f32.partialorder %v870, 0.0
        %vm937 = vcmp.gt.f32.partialorder %v872, 0.0
        %v938 = vmul.f32 %v716, 0.01
        %v939 = vmul.f32 %v718, 0.01
        %v940 = vmul.f32 %v720, 0.01
        %v941 = vmul.f32 %v722, 0.01
        %v942 = vmul.f32 %v726, 0.01
        %v943 = vmul.f32 %v728, 0.01
        %v944 = vmul.f32 %v730, 0.01
        %v945 = vmul.f32 %v732, 0.01
        %v946 = vmul.f32 %v736, 0.01
        %v947 = vmul.f32 %v738, 0.01
        %v948 = vmul.f32 %v740, 0.01
        %v949 = vmul.f32 %v742, 0.01
        %v950 = vmul.f32 %v746, 0.01
        %v951 = vmul.f32 %v748, 0.01
        %v952 = vmul.f32 %v750, 0.01
        %v953 = vmul.f32 %v752, 0.01
        %v954 = vmul.f32 %v756, 0.01
        %v955 = vmul.f32 %v758, 0.01
        %v956 = vmul.f32 %v760, 0.01
        %v957 = vmul.f32 %v762, 0.01
        %v958 = vmul.f32 %v766, 0.01
        %v959 = vmul.f32 %v768, 0.01
        %v960 = vmul.f32 %v770, 0.01
        %v961 = vmul.f32 %v772, 0.01
        %v962 = vmul.f32 %v776, 0.01
        %v963 = vmul.f32 %v778, 0.01
        %v964 = vmul.f32 %v780, 0.01
        %v965 = vmul.f32 %v782, 0.01
        %v966 = vmul.f32 %v786, 0.01
        %v967 = vmul.f32 %v788, 0.01
        %v968 = vmul.f32 %v790, 0.01
        %v969 = vmul.f32 %v792, 0.01
        %v970 = vmul.f32 %v796, 0.01
        %v971 = vmul.f32 %v798, 0.01
        %v972 = vmul.f32 %v800, 0.01
        %v973 = vmul.f32 %v802, 0.01
        %v974 = vmul.f32 %v806, 0.01
        %v975 = vmul.f32 %v808, 0.01
        %v976 = vmul.f32 %v810, 0.01
        %v977 = vmul.f32 %v812, 0.01
        %v978 = vmul.f32 %v816, 0.01
        %v979 = vmul.f32 %v818, 0.01
        %v980 = vmul.f32 %v820, 0.01
        %v981 = vmul.f32 %v822, 0.01
        %v982 = vmul.f32 %v826, 0.01
        %v983 = vmul.f32 %v828, 0.01
        %v984 = vmul.f32 %v830, 0.01
        %v985 = vmul.f32 %v832, 0.01
        %v986 = vmul.f32 %v836, 0.01
        %v987 = vmul.f32 %v838, 0.01
        %v988 = vmul.f32 %v840, 0.01
        %v989 = vmul.f32 %v842, 0.01
        %v990 = vmul.f32 %v846, 0.01
        %v991 = vmul.f32 %v848, 0.01
        %v992 = vmul.f32 %v850, 0.01
        %v993 = vmul.f32 %v852, 0.01
        %v994 = vmul.f32 %v856, 0.01
        %v995 = vmul.f32 %v858, 0.01
        %v996 = vmul.f32 %v860, 0.01
        %v997 = vmul.f32 %v862, 0.01
        %v998 = vmul.f32 %v866, 0.01
        %v999 = vmul.f32 %v868, 0.01
        %v1000 = vmul.f32 %v870, 0.01
        %v1001 = vmul.f32 %v872, 0.01
        %v1002 = vsel %vm874, %v716, %v938
        %v1003 = vsel %vm875, %v718, %v939
        %v1004 = vsel %vm876, %v720, %v940
        %v1005 = vsel %vm877, %v722, %v941
        %v1006 = vsel %vm878, %v726, %v942
        %v1007 = vsel %vm879, %v728, %v943
        %v1008 = vsel %vm880, %v730, %v944
        %v1009 = vsel %vm881, %v732, %v945
        %v1010 = vsel %vm882, %v736, %v946
        %v1011 = vsel %vm883, %v738, %v947
        %v1012 = vsel %vm884, %v740, %v948
        %v1013 = vsel %vm885, %v742, %v949
        %v1014 = vsel %vm886, %v746, %v950
        %v1015 = vsel %vm887, %v748, %v951
        %v1016 = vsel %vm888, %v750, %v952
        %v1017 = vsel %vm889, %v752, %v953
        %v1018 = vsel %vm890, %v756, %v954
        %v1019 = vsel %vm891, %v758, %v955
        %v1020 = vsel %vm892, %v760, %v956
        %v1021 = vsel %vm893, %v762, %v957
        %v1022 = vsel %vm894, %v766, %v958
        %v1023 = vsel %vm895, %v768, %v959
        %v1024 = vsel %vm896, %v770, %v960
        %v1025 = vsel %vm897, %v772, %v961
        %v1026 = vsel %vm898, %v776, %v962
        %v1027 = vsel %vm899, %v778, %v963
        %v1028 = vsel %vm900, %v780, %v964
        %v1029 = vsel %vm901, %v782, %v965
        %v1030 = vsel %vm902, %v786, %v966
        %v1031 = vsel %vm903, %v788, %v967
        %v1032 = vsel %vm904, %v790, %v968
        %v1033 = vsel %vm905, %v792, %v969
        %v1034 = vsel %vm906, %v796, %v970
        %v1035 = vsel %vm907, %v798, %v971
        %v1036 = vsel %vm908, %v800, %v972
        %v1037 = vsel %vm909, %v802, %v973
        %v1038 = vsel %vm910, %v806, %v974
        %v1039 = vsel %vm911, %v808, %v975
        %v1040 = vsel %vm912, %v810, %v976
        %v1041 = vsel %vm913, %v812, %v977
        %v1042 = vsel %vm914, %v816, %v978
        %v1043 = vsel %vm915, %v818, %v979
        %v1044 = vsel %vm916, %v820, %v980
        %v1045 = vsel %vm917, %v822, %v981
        %v1046 = vsel %vm918, %v826, %v982
        %v1047 = vsel %vm919, %v828, %v983
        %v1048 = vsel %vm920, %v830, %v984
        %v1049 = vsel %vm921, %v832, %v985
        %v1050 = vsel %vm922, %v836, %v986
        %v1051 = vsel %vm923, %v838, %v987
        %v1052 = vsel %vm924, %v840, %v988
        %v1053 = vsel %vm925, %v842, %v989
        %v1054 = vsel %vm926, %v846, %v990
        %v1055 = vsel %vm927, %v848, %v991
        %v1056 = vsel %vm928, %v850, %v992
        %v1057 = vsel %vm929, %v852, %v993
        %v1058 = vsel %vm930, %v856, %v994
        %v1059 = vsel %vm931, %v858, %v995
        %v1060 = vsel %vm932, %v860, %v996
        %v1061 = vsel %vm933, %v862, %v997
        %v1062 = vsel %vm934, %v866, %v998
        %v1063 = vsel %vm935, %v868, %v999
        %v1064 = vsel %vm936, %v870, %v1000
        %v1065 = vsel %vm937, %v872, %v1001
        %v1066 = vld [vmem:[%s3] sm:$0xff]
        %v1067 = vld [vmem:[%s3 + $0x8] sm:$0xff]
        %v1068 = vld [vmem:[%s3 + $0x10] sm:$0xff]
        %v1069 = vld [vmem:[%s3 + $0x18] sm:$0xff]
        %v1070 = vld [vmem:[%s3 + $0x20] sm:$0xff]
        %v1071 = vld [vmem:[%s3 + $0x28] sm:$0xff]
        %v1072 = vld [vmem:[%s3 + $0x30] sm:$0xff]
        %v1073 = vld [vmem:[%s3 + $0x38] sm:$0xff]
        %v1074 = vld [vmem:[%s3 + $0x40] sm:$0xff]
        %v1075 = vld [vmem:[%s3 + $0x48] sm:$0xff]
        %v1076 = vld [vmem:[%s3 + $0x50] sm:$0xff]
        %v1077 = vld [vmem:[%s3 + $0x58] sm:$0xff]
        %v1078 = vld [vmem:[%s3 + $0x60] sm:$0xff]
        %v1079 = vld [vmem:[%s3 + $0x68] sm:$0xff]
        %v1080 = vld [vmem:[%s3 + $0x70] sm:$0xff]
        %v1081 = vld [vmem:[%s3 + $0x78] sm:$0xff]
        %v1082 = vpack.c.bf16 %v1004, %v1002
        %v1083 = vpack.c.bf16 %v1005, %v1003
        %v1084 = vpack.c.bf16 %v1008, %v1006
        %v1085 = vpack.c.bf16 %v1009, %v1007
        %v1086 = vpack.c.bf16 %v1012, %v1010
        %v1087 = vpack.c.bf16 %v1013, %v1011
        %v1088 = vpack.c.bf16 %v1016, %v1014
        %v1089 = vpack.c.bf16 %v1017, %v1015
        %v1090 = vpack.c.bf16 %v1020, %v1018
        %v1091 = vpack.c.bf16 %v1021, %v1019
        %v1092 = vpack.c.bf16 %v1024, %v1022
        %v1093 = vpack.c.bf16 %v1025, %v1023
        %v1094 = vpack.c.bf16 %v1028, %v1026
        %v1095 = vpack.c.bf16 %v1029, %v1027
        %v1096 = vpack.c.bf16 %v1032, %v1030
        %v1097 = vpack.c.bf16 %v1033, %v1031
        %v1098 = vpack.c.bf16 %v1036, %v1034
        %v1099 = vpack.c.bf16 %v1037, %v1035
        %v1100 = vpack.c.bf16 %v1040, %v1038
        %v1101 = vpack.c.bf16 %v1041, %v1039
        %v1102 = vpack.c.bf16 %v1044, %v1042
        %v1103 = vpack.c.bf16 %v1045, %v1043
        %v1104 = vpack.c.bf16 %v1048, %v1046
        %v1105 = vpack.c.bf16 %v1049, %v1047
        %v1106 = vpack.c.bf16 %v1052, %v1050
        %v1107 = vpack.c.bf16 %v1053, %v1051
        %v1108 = vpack.c.bf16 %v1056, %v1054
        %v1109 = vpack.c.bf16 %v1057, %v1055
        %v1110 = vpack.c.bf16 %v1060, %v1058
        %v1111 = vpack.c.bf16 %v1061, %v1059
        %v1112 = vpack.c.bf16 %v1064, %v1062
        %v1113 = vpack.c.bf16 %v1065, %v1063
        %v1114 = vld [vmem:[%s4] sm:$0xff]
        %v1115 = vld [vmem:[%s4 + $0x8] sm:$0xff]
        %v1116 = vld [vmem:[%s4 + $0x10] sm:$0xff]
        %v1117 = vld [vmem:[%s4 + $0x18] sm:$0xff]
        %v1118 = vld [vmem:[%s4 + $0x20] sm:$0xff]
        %v1119 = vld [vmem:[%s4 + $0x28] sm:$0xff]
        %v1120 = vld [vmem:[%s4 + $0x30] sm:$0xff]
        %v1121 = vld [vmem:[%s4 + $0x38] sm:$0xff]
        %v1122 = vld [vmem:[%s4 + $0x40] sm:$0xff]
        %v1123 = vld [vmem:[%s4 + $0x48] sm:$0xff]
        %v1124 = vld [vmem:[%s4 + $0x50] sm:$0xff]
        %v1125 = vld [vmem:[%s4 + $0x58] sm:$0xff]
        %v1126 = vld [vmem:[%s4 + $0x60] sm:$0xff]
        %v1127 = vld [vmem:[%s4 + $0x68] sm:$0xff]
        %v1128 = vld [vmem:[%s4 + $0x70] sm:$0xff]
        %v1129 = vld [vmem:[%s4 + $0x78] sm:$0xff]
        %1131 = vset.pattern.permute.xlu0 0
        %1132 = vperm.xlu0 %1131, %v1114
        %v1133 = vpop.permute.xlu0 %1132
        %1136 = vset.pattern.permute.xlu0 0
        %1137 = vperm.xlu0 %1136, %v1115
        %v1138 = vpop.permute.xlu0 %1137
        %1141 = vset.pattern.permute.xlu0 0
        %1142 = vperm.xlu0 %1141, %v1116
        %v1143 = vpop.permute.xlu0 %1142
        %1146 = vset.pattern.permute.xlu0 0
        %1147 = vperm.xlu0 %1146, %v1117
        %v1148 = vpop.permute.xlu0 %1147
        %1151 = vset.pattern.permute.xlu0 0
        %1152 = vperm.xlu0 %1151, %v1118
        %v1153 = vpop.permute.xlu0 %1152
        %1156 = vset.pattern.permute.xlu0 0
        %1157 = vperm.xlu0 %1156, %v1119
        %v1158 = vpop.permute.xlu0 %1157
        %1161 = vset.pattern.permute.xlu0 0
        %1162 = vperm.xlu0 %1161, %v1120
        %v1163 = vpop.permute.xlu0 %1162
        %1166 = vset.pattern.permute.xlu0 0
        %1167 = vperm.xlu0 %1166, %v1121
        %v1168 = vpop.permute.xlu0 %1167
        %1171 = vset.pattern.permute.xlu0 0
        %1172 = vperm.xlu0 %1171, %v1122
        %v1173 = vpop.permute.xlu0 %1172
        %1176 = vset.pattern.permute.xlu0 0
        %1177 = vperm.xlu0 %1176, %v1123
        %v1178 = vpop.permute.xlu0 %1177
        %1181 = vset.pattern.permute.xlu0 0
        %1182 = vperm.xlu0 %1181, %v1124
        %v1183 = vpop.permute.xlu0 %1182
        %1186 = vset.pattern.permute.xlu0 0
        %1187 = vperm.xlu0 %1186, %v1125
        %v1188 = vpop.permute.xlu0 %1187
        %1191 = vset.pattern.permute.xlu0 0
        %1192 = vperm.xlu0 %1191, %v1126
        %v1193 = vpop.permute.xlu0 %1192
        %1196 = vset.pattern.permute.xlu0 0
        %1197 = vperm.xlu0 %1196, %v1127
        %v1198 = vpop.permute.xlu0 %1197
        %1201 = vset.pattern.permute.xlu0 0
        %1202 = vperm.xlu0 %1201, %v1128
        %v1203 = vpop.permute.xlu0 %1202
        %1206 = vset.pattern.permute.xlu0 0
        %1207 = vperm.xlu0 %1206, %v1129
        %v1208 = vpop.permute.xlu0 %1207
        %v1226 = vunpack.c.l.b16 %v1066
        %v1227 = vunpack.c.h.b16 %v1066
        %v1228 = vunpack.c.l.b16 %v1067
        %v1229 = vunpack.c.h.b16 %v1067
        %v1230 = vunpack.c.l.b16 %v1068
        %v1231 = vunpack.c.h.b16 %v1068
        %v1232 = vunpack.c.l.b16 %v1069
        %v1233 = vunpack.c.h.b16 %v1069
        %v1234 = vunpack.c.l.b16 %v1070
        %v1235 = vunpack.c.h.b16 %v1070
        %v1236 = vunpack.c.l.b16 %v1071
        %v1237 = vunpack.c.h.b16 %v1071
        %v1238 = vunpack.c.l.b16 %v1072
        %v1239 = vunpack.c.h.b16 %v1072
        %v1240 = vunpack.c.l.b16 %v1073
        %v1241 = vunpack.c.h.b16 %v1073
        %v1242 = vunpack.c.l.b16 %v1074
        %v1243 = vunpack.c.h.b16 %v1074
        %v1244 = vunpack.c.l.b16 %v1075
        %v1245 = vunpack.c.h.b16 %v1075
        %v1246 = vunpack.c.l.b16 %v1076
        %v1247 = vunpack.c.h.b16 %v1076
        %v1248 = vunpack.c.l.b16 %v1077
        %v1249 = vunpack.c.h.b16 %v1077
        %v1250 = vunpack.c.l.b16 %v1078
        %v1251 = vunpack.c.h.b16 %v1078
        %v1252 = vunpack.c.l.b16 %v1079
        %v1253 = vunpack.c.h.b16 %v1079
        %v1254 = vunpack.c.l.b16 %v1080
        %v1255 = vunpack.c.h.b16 %v1080
        %v1256 = vunpack.c.l.b16 %v1081
        %v1257 = vunpack.c.h.b16 %v1081
        %v1258 = vpack.c.b16 %v1228, %v1226
        %v1259 = vpack.c.b16 %v1229, %v1227
        %v1260 = vpack.c.b16 %v1232, %v1230
        %v1261 = vpack.c.b16 %v1233, %v1231
        %v1262 = vpack.c.b16 %v1236, %v1234
        %v1263 = vpack.c.b16 %v1237, %v1235
        %v1264 = vpack.c.b16 %v1240, %v1238
        %v1265 = vpack.c.b16 %v1241, %v1239
        %v1266 = vpack.c.b16 %v1244, %v1242
        %v1267 = vpack.c.b16 %v1245, %v1243
        %v1268 = vpack.c.b16 %v1248, %v1246
        %v1269 = vpack.c.b16 %v1249, %v1247
        %v1270 = vpack.c.b16 %v1252, %v1250
        %v1271 = vpack.c.b16 %v1253, %v1251
        %v1272 = vpack.c.b16 %v1256, %v1254
        %v1273 = vpack.c.b16 %v1257, %v1255
        %1290 = vmatprep.subr.bf16.mxu0 %v1083
        %1291 = vmatpush1.bf16.msra.mxu0 %v1082
        %1292 = vmatprep.subr.bf16.mxu0 %v1085
        %1293 = vmatpush1.bf16.msra.mxu0 %v1084
        %1294 = vmatprep.subr.bf16.mxu0 %v1087
        %1295 = vmatpush1.bf16.msra.mxu0 %v1086
        %1296 = vmatprep.subr.bf16.mxu0 %v1089
        %1297 = vmatpush1.bf16.msra.mxu0 %v1088
        %1298 = vmatprep.subr.bf16.mxu0 %v1091
        %1299 = vmatpush1.bf16.msra.mxu0 %v1090
        %1300 = vmatprep.subr.bf16.mxu0 %v1093
        %1301 = vmatpush1.bf16.msra.mxu0 %v1092
        %1302 = vmatprep.subr.bf16.mxu0 %v1095
        %1303 = vmatpush1.bf16.msra.mxu0 %v1094
        %1304 = vmatprep.subr.bf16.mxu0 %v1097
        %1305 = vmatpush1.bf16.msra.mxu0 %v1096
        %1306 = vmatprep.subr.bf16.mxu0 %v1099
        %1307 = vmatpush1.bf16.msra.mxu0 %v1098
        %1308 = vmatprep.subr.bf16.mxu0 %v1101
        %1309 = vmatpush1.bf16.msra.mxu0 %v1100
        %1310 = vmatprep.subr.bf16.mxu0 %v1103
        %1311 = vmatpush1.bf16.msra.mxu0 %v1102
        %1312 = vmatprep.subr.bf16.mxu0 %v1105
        %1313 = vmatpush1.bf16.msra.mxu0 %v1104
        %1314 = vmatprep.subr.bf16.mxu0 %v1107
        %1315 = vmatpush1.bf16.msra.mxu0 %v1106
        %1316 = vmatprep.subr.bf16.mxu0 %v1109
        %1317 = vmatpush1.bf16.msra.mxu0 %v1108
        %1318 = vmatprep.subr.bf16.mxu0 %v1111
        %1319 = vmatpush1.bf16.msra.mxu0 %v1110
        %1320 = vmatprep.subr.bf16.mxu0 %v1113
        %1321 = vmatpush1.bf16.msra.mxu0 %v1112
        %1322 = vmatprep.mubr.bf16.mxu0 %v1259
        %1323 = vmatmul.mubr.bf16.gmra.mrb[0].mxu0 %v1258
        %v1324 = vpop.f32.mrb[0].mxu0
        %v1325 = vadd.f32 %v1133, %v1324
        %v1326 = vpop.f32.mrb[0].mxu0
        %v1327 = vadd.f32 %v1133, %v1326
        %v1328 = vpop.f32.mrb[0].mxu0
        %v1329 = vadd.f32 %v1138, %v1328
        %v1330 = vpop.f32.mrb[0].mxu0
        %v1331 = vadd.f32 %v1138, %v1330
        %1332 = vmatprep.mubr.bf16.mxu0 %v1261
        %1333 = vmatmul.mubr.bf16.gmra.mrb[0].mxu0 %v1260
        %v1334 = vpop.f32.mrb[0].mxu0
        %v1335 = vadd.f32 %v1143, %v1334
        %v1336 = vpop.f32.mrb[0].mxu0
        %v1337 = vadd.f32 %v1143, %v1336
        %v1338 = vpop.f32.mrb[0].mxu0
        %v1339 = vadd.f32 %v1148, %v1338
        %v1340 = vpop.f32.mrb[0].mxu0
        %v1341 = vadd.f32 %v1148, %v1340
        %1342 = vmatprep.mubr.bf16.mxu0 %v1263
        %1343 = vmatmul.mubr.bf16.gmra.mrb[0].mxu0 %v1262
        %v1344 = vpop.f32.mrb[0].mxu0
        %v1345 = vadd.f32 %v1153, %v1344
        %v1346 = vpop.f32.mrb[0].mxu0
        %v1347 = vadd.f32 %v1153, %v1346
        %v1348 = vpop.f32.mrb[0].mxu0
        %v1349 = vadd.f32 %v1158, %v1348
        %v1350 = vpop.f32.mrb[0].mxu0
        %v1351 = vadd.f32 %v1158, %v1350
        %1352 = vmatprep.mubr.bf16.mxu0 %v1265
        %1353 = vmatmul.mubr.bf16.gmra.mrb[0].mxu0 %v1264
        %v1354 = vpop.f32.mrb[0].mxu0
        %v1355 = vadd.f32 %v1163, %v1354
        %v1356 = vpop.f32.mrb[0].mxu0
        %v1357 = vadd.f32 %v1163, %v1356
        %v1358 = vpop.f32.mrb[0].mxu0
        %v1359 = vadd.f32 %v1168, %v1358
        %v1360 = vpop.f32.mrb[0].mxu0
        %v1361 = vadd.f32 %v1168, %v1360
        %1362 = vmatprep.mubr.bf16.mxu0 %v1267
        %1363 = vmatmul.mubr.bf16.gmra.mrb[0].mxu0 %v1266
        %v1364 = vpop.f32.mrb[0].mxu0
        %v1365 = vadd.f32 %v1173, %v1364
        %v1366 = vpop.f32.mrb[0].mxu0
        %v1367 = vadd.f32 %v1173, %v1366
        %v1368 = vpop.f32.mrb[0].mxu0
        %v1369 = vadd.f32 %v1178, %v1368
        %v1370 = vpop.f32.mrb[0].mxu0
        %v1371 = vadd.f32 %v1178, %v1370
        %1372 = vmatprep.mubr.bf16.mxu0 %v1269
        %1373 = vmatmul.mubr.bf16.gmra.mrb[0].mxu0 %v1268
        %v1374 = vpop.f32.mrb[0].mxu0
        %v1375 = vadd.f32 %v1183, %v1374
        %v1376 = vpop.f32.mrb[0].mxu0
        %v1377 = vadd.f32 %v1183, %v1376
        %v1378 = vpop.f32.mrb[0].mxu0
        %v1379 = vadd.f32 %v1188, %v1378
        %v1380 = vpop.f32.mrb[0].mxu0
        %v1381 = vadd.f32 %v1188, %v1380
        %1382 = vmatprep.mubr.bf16.mxu0 %v1271
        %1383 = vmatmul.mubr.bf16.gmra.mrb[0].mxu0 %v1270
        %v1384 = vpop.f32.mrb[0].mxu0
        %v1385 = vadd.f32 %v1193, %v1384
        %v1386 = vpop.f32.mrb[0].mxu0
        %v1387 = vadd.f32 %v1193, %v1386
        %v1388 = vpop.f32.mrb[0].mxu0
        %v1389 = vadd.f32 %v1198, %v1388
        %v1390 = vpop.f32.mrb[0].mxu0
        %v1391 = vadd.f32 %v1198, %v1390
        %1392 = vmatprep.mubr.bf16.mxu0 %v1273
        %1393 = vmatmul.mubr.bf16.gmra.mrb[0].mxu0 %v1272
        %v1394 = vpop.f32.mrb[0].mxu0
        %v1395 = vadd.f32 %v1203, %v1394
        %v1396 = vpop.f32.mrb[0].mxu0
        %v1397 = vadd.f32 %v1203, %v1396
        %v1398 = vpop.f32.mrb[0].mxu0
        %v1399 = vadd.f32 %v1208, %v1398
        %v1400 = vpop.f32.mrb[0].mxu0
        %v1401 = vadd.f32 %v1208, %v1400
        %1402 = vdwg.mxu0
        %vm1403 = vcmp.gt.f32.partialorder %v1325, 0.0
        %vm1404 = vcmp.gt.f32.partialorder %v1327, 0.0
        %vm1405 = vcmp.gt.f32.partialorder %v1329, 0.0
        %vm1406 = vcmp.gt.f32.partialorder %v1331, 0.0
        %vm1407 = vcmp.gt.f32.partialorder %v1335, 0.0
        %vm1408 = vcmp.gt.f32.partialorder %v1337, 0.0
        %vm1409 = vcmp.gt.f32.partialorder %v1339, 0.0
        %vm1410 = vcmp.gt.f32.partialorder %v1341, 0.0
        %vm1411 = vcmp.gt.f32.partialorder %v1345, 0.0
        %vm1412 = vcmp.gt.f32.partialorder %v1347, 0.0
        %vm1413 = vcmp.gt.f32.partialorder %v1349, 0.0
        %vm1414 = vcmp.gt.f32.partialorder %v1351, 0.0
        %vm1415 = vcmp.gt.f32.partialorder %v1355, 0.0
        %vm1416 = vcmp.gt.f32.partialorder %v1357, 0.0
        %vm1417 = vcmp.gt.f32.partialorder %v1359, 0.0
        %vm1418 = vcmp.gt.f32.partialorder %v1361, 0.0
        %vm1419 = vcmp.gt.f32.partialorder %v1365, 0.0
        %vm1420 = vcmp.gt.f32.partialorder %v1367, 0.0
        %vm1421 = vcmp.gt.f32.partialorder %v1369, 0.0
        %vm1422 = vcmp.gt.f32.partialorder %v1371, 0.0
        %vm1423 = vcmp.gt.f32.partialorder %v1375, 0.0
        %vm1424 = vcmp.gt.f32.partialorder %v1377, 0.0
        %vm1425 = vcmp.gt.f32.partialorder %v1379, 0.0
        %vm1426 = vcmp.gt.f32.partialorder %v1381, 0.0
        %vm1427 = vcmp.gt.f32.partialorder %v1385, 0.0
        %vm1428 = vcmp.gt.f32.partialorder %v1387, 0.0
        %vm1429 = vcmp.gt.f32.partialorder %v1389, 0.0
        %vm1430 = vcmp.gt.f32.partialorder %v1391, 0.0
        %vm1431 = vcmp.gt.f32.partialorder %v1395, 0.0
        %vm1432 = vcmp.gt.f32.partialorder %v1397, 0.0
        %vm1433 = vcmp.gt.f32.partialorder %v1399, 0.0
        %vm1434 = vcmp.gt.f32.partialorder %v1401, 0.0
        %v1435 = vmul.f32 %v1325, 0.01
        %v1436 = vmul.f32 %v1327, 0.01
        %v1437 = vmul.f32 %v1329, 0.01
        %v1438 = vmul.f32 %v1331, 0.01
        %v1439 = vmul.f32 %v1335, 0.01
        %v1440 = vmul.f32 %v1337, 0.01
        %v1441 = vmul.f32 %v1339, 0.01
        %v1442 = vmul.f32 %v1341, 0.01
        %v1443 = vmul.f32 %v1345, 0.01
        %v1444 = vmul.f32 %v1347, 0.01
        %v1445 = vmul.f32 %v1349, 0.01
        %v1446 = vmul.f32 %v1351, 0.01
        %v1447 = vmul.f32 %v1355, 0.01
        %v1448 = vmul.f32 %v1357, 0.01
        %v1449 = vmul.f32 %v1359, 0.01
        %v1450 = vmul.f32 %v1361, 0.01
        %v1451 = vmul.f32 %v1365, 0.01
        %v1452 = vmul.f32 %v1367, 0.01
        %v1453 = vmul.f32 %v1369, 0.01
        %v1454 = vmul.f32 %v1371, 0.01
        %v1455 = vmul.f32 %v1375, 0.01
        %v1456 = vmul.f32 %v1377, 0.01
        %v1457 = vmul.f32 %v1379, 0.01
        %v1458 = vmul.f32 %v1381, 0.01
        %v1459 = vmul.f32 %v1385, 0.01
        %v1460 = vmul.f32 %v1387, 0.01
        %v1461 = vmul.f32 %v1389, 0.01
        %v1462 = vmul.f32 %v1391, 0.01
        %v1463 = vmul.f32 %v1395, 0.01
        %v1464 = vmul.f32 %v1397, 0.01
        %v1465 = vmul.f32 %v1399, 0.01
        %v1466 = vmul.f32 %v1401, 0.01
        %v1467 = vsel %vm1403, %v1325, %v1435
        %v1468 = vsel %vm1404, %v1327, %v1436
        %v1469 = vsel %vm1405, %v1329, %v1437
        %v1470 = vsel %vm1406, %v1331, %v1438
        %v1471 = vsel %vm1407, %v1335, %v1439
        %v1472 = vsel %vm1408, %v1337, %v1440
        %v1473 = vsel %vm1409, %v1339, %v1441
        %v1474 = vsel %vm1410, %v1341, %v1442
        %v1475 = vsel %vm1411, %v1345, %v1443
        %v1476 = vsel %vm1412, %v1347, %v1444
        %v1477 = vsel %vm1413, %v1349, %v1445
        %v1478 = vsel %vm1414, %v1351, %v1446
        %v1479 = vsel %vm1415, %v1355, %v1447
        %v1480 = vsel %vm1416, %v1357, %v1448
        %v1481 = vsel %vm1417, %v1359, %v1449
        %v1482 = vsel %vm1418, %v1361, %v1450
        %v1483 = vsel %vm1419, %v1365, %v1451
        %v1484 = vsel %vm1420, %v1367, %v1452
        %v1485 = vsel %vm1421, %v1369, %v1453
        %v1486 = vsel %vm1422, %v1371, %v1454
        %v1487 = vsel %vm1423, %v1375, %v1455
        %v1488 = vsel %vm1424, %v1377, %v1456
        %v1489 = vsel %vm1425, %v1379, %v1457
        %v1490 = vsel %vm1426, %v1381, %v1458
        %v1491 = vsel %vm1427, %v1385, %v1459
        %v1492 = vsel %vm1428, %v1387, %v1460
        %v1493 = vsel %vm1429, %v1389, %v1461
        %v1494 = vsel %vm1430, %v1391, %v1462
        %v1495 = vsel %vm1431, %v1395, %v1463
        %v1496 = vsel %vm1432, %v1397, %v1464
        %v1497 = vsel %vm1433, %v1399, %v1465
        %v1498 = vsel %vm1434, %v1401, %v1466
        %v1499 = vld [vmem:[%s5] sm:$0xff]
        %v1500 = vld [vmem:[%s5 + $0x8] sm:$0xff]
        %v1501 = vld [vmem:[%s5 + $0x10] sm:$0xff]
        %v1502 = vld [vmem:[%s5 + $0x18] sm:$0xff]
        %v1503 = vld [vmem:[%s5 + $0x20] sm:$0xff]
        %v1504 = vld [vmem:[%s5 + $0x28] sm:$0xff]
        %v1505 = vld [vmem:[%s5 + $0x30] sm:$0xff]
        %v1506 = vld [vmem:[%s5 + $0x38] sm:$0xff]
        %v1507 = vld [vmem:[%s5 + $0x40] sm:$0xff]
        %v1508 = vld [vmem:[%s5 + $0x48] sm:$0xff]
        %v1509 = vld [vmem:[%s5 + $0x50] sm:$0xff]
        %v1510 = vld [vmem:[%s5 + $0x58] sm:$0xff]
        %v1511 = vld [vmem:[%s5 + $0x60] sm:$0xff]
        %v1512 = vld [vmem:[%s5 + $0x68] sm:$0xff]
        %v1513 = vld [vmem:[%s5 + $0x70] sm:$0xff]
        %v1514 = vld [vmem:[%s5 + $0x78] sm:$0xff]
        %1516 = vset.pattern.permute.xlu0 0
        %1517 = vperm.xlu0 %1516, %v1499
        %v1518 = vpop.permute.xlu0 %1517
        %1521 = vset.pattern.permute.xlu0 0
        %1522 = vperm.xlu0 %1521, %v1500
        %v1523 = vpop.permute.xlu0 %1522
        %1526 = vset.pattern.permute.xlu0 0
        %1527 = vperm.xlu0 %1526, %v1501
        %v1528 = vpop.permute.xlu0 %1527
        %1531 = vset.pattern.permute.xlu0 0
        %1532 = vperm.xlu0 %1531, %v1502
        %v1533 = vpop.permute.xlu0 %1532
        %1536 = vset.pattern.permute.xlu0 0
        %1537 = vperm.xlu0 %1536, %v1503
        %v1538 = vpop.permute.xlu0 %1537
        %1541 = vset.pattern.permute.xlu0 0
        %1542 = vperm.xlu0 %1541, %v1504
        %v1543 = vpop.permute.xlu0 %1542
        %1546 = vset.pattern.permute.xlu0 0
        %1547 = vperm.xlu0 %1546, %v1505
        %v1548 = vpop.permute.xlu0 %1547
        %1551 = vset.pattern.permute.xlu0 0
        %1552 = vperm.xlu0 %1551, %v1506
        %v1553 = vpop.permute.xlu0 %1552
        %1556 = vset.pattern.permute.xlu0 0
        %1557 = vperm.xlu0 %1556, %v1507
        %v1558 = vpop.permute.xlu0 %1557
        %1561 = vset.pattern.permute.xlu0 0
        %1562 = vperm.xlu0 %1561, %v1508
        %v1563 = vpop.permute.xlu0 %1562
        %1566 = vset.pattern.permute.xlu0 0
        %1567 = vperm.xlu0 %1566, %v1509
        %v1568 = vpop.permute.xlu0 %1567
        %1571 = vset.pattern.permute.xlu0 0
        %1572 = vperm.xlu0 %1571, %v1510
        %v1573 = vpop.permute.xlu0 %1572
        %1576 = vset.pattern.permute.xlu0 0
        %1577 = vperm.xlu0 %1576, %v1511
        %v1578 = vpop.permute.xlu0 %1577
        %1581 = vset.pattern.permute.xlu0 0
        %1582 = vperm.xlu0 %1581, %v1512
        %v1583 = vpop.permute.xlu0 %1582
        %1586 = vset.pattern.permute.xlu0 0
        %1587 = vperm.xlu0 %1586, %v1513
        %v1588 = vpop.permute.xlu0 %1587
        %1591 = vset.pattern.permute.xlu0 0
        %1592 = vperm.xlu0 %1591, %v1514
        %v1593 = vpop.permute.xlu0 %1592
        %v1595 = vmul.f32 %v1467, %v1518
        %v1596 = vmul.f32 %v1468, %v1518
        %v1597 = vmul.f32 %v1469, %v1523
        %v1598 = vmul.f32 %v1470, %v1523
        %v1599 = vmul.f32 %v1471, %v1528
        %v1600 = vmul.f32 %v1472, %v1528
        %v1601 = vmul.f32 %v1473, %v1533
        %v1602 = vmul.f32 %v1474, %v1533
        %v1603 = vmul.f32 %v1475, %v1538
        %v1604 = vmul.f32 %v1476, %v1538
        %v1605 = vmul.f32 %v1477, %v1543
        %v1606 = vmul.f32 %v1478, %v1543
        %v1607 = vmul.f32 %v1479, %v1548
        %v1608 = vmul.f32 %v1480, %v1548
        %v1609 = vmul.f32 %v1481, %v1553
        %v1610 = vmul.f32 %v1482, %v1553
        %v1611 = vmul.f32 %v1483, %v1558
        %v1612 = vmul.f32 %v1484, %v1558
        %v1613 = vmul.f32 %v1485, %v1563
        %v1614 = vmul.f32 %v1486, %v1563
        %v1615 = vmul.f32 %v1487, %v1568
        %v1616 = vmul.f32 %v1488, %v1568
        %v1617 = vmul.f32 %v1489, %v1573
        %v1618 = vmul.f32 %v1490, %v1573
        %v1619 = vmul.f32 %v1491, %v1578
        %v1620 = vmul.f32 %v1492, %v1578
        %v1621 = vmul.f32 %v1493, %v1583
        %v1622 = vmul.f32 %v1494, %v1583
        %v1623 = vmul.f32 %v1495, %v1588
        %v1624 = vmul.f32 %v1496, %v1588
        %v1625 = vmul.f32 %v1497, %v1593
        %v1626 = vmul.f32 %v1498, %v1593
        %v1627 = vadd.f32 %v1595, %v1597
        %v1628 = vadd.f32 %v1627, %v1599
        %v1629 = vadd.f32 %v1628, %v1601
        %v1630 = vadd.f32 %v1629, %v1603
        %v1631 = vadd.f32 %v1630, %v1605
        %v1632 = vadd.f32 %v1631, %v1607
        %v1633 = vadd.f32 %v1632, %v1609
        %v1634 = vadd.f32 %v1633, %v1611
        %v1635 = vadd.f32 %v1634, %v1613
        %v1636 = vadd.f32 %v1635, %v1615
        %v1637 = vadd.f32 %v1636, %v1617
        %v1638 = vadd.f32 %v1637, %v1619
        %v1639 = vadd.f32 %v1638, %v1621
        %v1640 = vadd.f32 %v1639, %v1623
        %v1641 = vadd.f32 %v1640, %v1625
        %v1642 = vrot.slane %v1641, 4
        %v1643 = vadd.f32 %v1641, %v1642
        %v1644 = vrot.slane %v1643, 2
        %v1645 = vadd.f32 %v1643, %v1644
        %v1646 = vrot.slane %v1645, 1
        %v1647 = vadd.f32 %v1645, %v1646
        %v1648 = vadd.f32 %v1596, %v1598
        %v1649 = vadd.f32 %v1648, %v1600
        %v1650 = vadd.f32 %v1649, %v1602
        %v1651 = vadd.f32 %v1650, %v1604
        %v1652 = vadd.f32 %v1651, %v1606
        %v1653 = vadd.f32 %v1652, %v1608
        %v1654 = vadd.f32 %v1653, %v1610
        %v1655 = vadd.f32 %v1654, %v1612
        %v1656 = vadd.f32 %v1655, %v1614
        %v1657 = vadd.f32 %v1656, %v1616
        %v1658 = vadd.f32 %v1657, %v1618
        %v1659 = vadd.f32 %v1658, %v1620
        %v1660 = vadd.f32 %v1659, %v1622
        %v1661 = vadd.f32 %v1660, %v1624
        %v1662 = vadd.f32 %v1661, %v1626
        %v1663 = vrot.slane %v1662, 4
        %v1664 = vadd.f32 %v1662, %v1663
        %v1665 = vrot.slane %v1664, 2
        %v1666 = vadd.f32 %v1664, %v1665
        %v1667 = vrot.slane %v1666, 1
        %v1668 = vadd.f32 %v1666, %v1667
        %v1669 = vld [vmem:[#allocation2] sm:$0x1]
        %1671 = vset.pattern.permute.xlu0 0
        %1672 = vperm.xlu0 %1671, %v1669
        %v1673 = vpop.permute.xlu0 %1672
        %v1675 = vlaneseq
        %v1676 = vshrl.u32 %v1675, 7
        %v1677 = vsub.s32 0, %v1676
        %v1678 = vrot.slane %v1673, %v1677
        %v1679 = vadd.f32 %v1647, %v1678
        %v1680 = vadd.f32 %v1668, %v1678
        %v1683 = vcombine.low %v1679, %v1680
        %v1685 = vunpack.c.l.s4 1966171168
        %v1686 = vunpack.c.0.s8 %v1685
        %v1687 = vlaneseq
        %v1688 = vshrl.u32 %v1687, 7
        %v1689 = vsub.s32 %v1686, %v1688
        %v1690 = vrot.slane %v1683, %v1689
        %v1692 = vunpack.c.l.s4 1966171168
        %v1693 = vunpack.c.0.s8 %v1692
        %v1694 = vlaneseq
        %v1695 = vshrl.u32 %v1694, 7
        %v1696 = vsub.s32 %v1693, %v1695
        %v1697 = vrot.slane %v1690, %v1696
        %v1699 = vlaneseq
        %vm1700 = vcmp.ge.s32.totalorder %v1699, 0
        %vm1701 = vcmp.lt.s32.totalorder %v1699, 256
        %vm1702 = vmand %vm1700, %vm1701
        %1703 = vst.msk [vmem:[%s298] sm:$0x3] %vm1702, %v1697
        %s1704 = sand.u32 %s199, 1
        %s1705 = scalar_lea.sflag [#allocation4], %s1704
        %s1706 = sand.u32 %s199, 1
        %s1707 = smul.addr %s1706, 2
        %s1708 = scalar_lea.vmem [#allocation3], %s1707
        // Predicated region
        $region49: #{tpu_custom_call.1} parent=47 // pred_check
          %p1709 = pneg %p209
        $region50: #{tpu_custom_call.1} parent=47 // pred_check_branch
          %1711 = sbr.rel (%p1709) target = $region52
        $region51: #{tpu_custom_call.1} parent=47 // pred_region
          %s1712 = smul.u32 2, %s28
          %s1714 = ssub.s32 32, 32
          %1715 = vsyncadd %s1705, %s1714
          %s1716 = smul.addr %s27, 2
          %s1717 = sadd.s32 %s1712, %s1716
          %s1718 = smul.addr %s1717, 16
          %s1719 = scalar_lea.hbm %s7, %s1718
          %s1721 = sshll.u32 %s1708, 4
          %s1722 = int_to_ptr.vmem [resolvable:$true] %s1721
          %1724 = dma.vmem_to_hbm [thread:$0]  %s1722, 32, %s1719, %s1705
        $region52: #{tpu_custom_call.1} parent=47 // pred_fallthru
          _
      $region48: #{tpu_custom_call.1} parent=5 // pred_fallthru
        _
      %p1725 = scmp.le.s32.totalorder 2, %s18
      // Predicated region
      $region53: #{tpu_custom_call.1} parent=5 // pred_check
        %p1726 = pneg %p1725
      $region54: #{tpu_custom_call.1} parent=5 // pred_check_branch
        %1728 = sbr.rel (%p1726) target = $region56
      $region55: #{tpu_custom_call.1} parent=5 // pred_region
        %s1729 = ssub.s32 %s18, 2
        // Predicated region
        $region57: #{tpu_custom_call.1} parent=55 // pred_check
          %p1730 = pneg %p215
        $region58: #{tpu_custom_call.1} parent=55 // pred_check_branch
          %1732 = sbr.rel (%p1730) target = $region60
        $region59: #{tpu_custom_call.1} parent=55 // pred_region
          %s1733 = sand.u32 %s200, 1
          %s1734 = scalar_lea.sflag [#allocation4], %s1733
          %s1735 = sand.u32 %s200, 1
          %s1736 = smul.addr %s1735, 2
          %s1737 = scalar_lea.vmem [#allocation3], %s1736
          %1738 = dma.done %s1734, 32
        $region60: #{tpu_custom_call.1} parent=55 // pred_fallthru
          _
      $region56: #{tpu_custom_call.1} parent=5 // pred_fallthru
        _
    $region6: #{tpu_custom_call.1} parent=1 // loop_footer
      %s22 = sadd.s32 1, %s18
    $region7: #{tpu_custom_call.1} parent=1 // loop_footer_branch
      %17 = sbr.rel target = $region3
    $region8: #{tpu_custom_call.1} parent=1 // loop_exit
      _
    %1739 = vsyncpa [#allocation4], 1
    %s1740 = scalar_lea.sflag [#allocation4], 1
    %1741 = vsyncpa %s1740, 1

</llo_original>
